<compile_context>
chip_gen: v6e
topology: v6e:2x2x1
jax: 0.10.0
libtpu: 0.0.40
codegen_flags: <defaults>
</compile_context>

<pallas_src>
import math

import jax
import jax.numpy as jnp
from jax.experimental import pallas as pl
from jax.experimental.pallas import tpu as pltpu

LN_EPS = 1e-5  # torch.nn.LayerNorm default


def _round_up(a, b):
    return ((a + b - 1) // b) * b


def _vmem_limit_bytes(frac=0.85, default_cap=128 * 1024 * 1024):
    """Generation-aware VMEM budget (v5e/v6e: 128 MiB, v7x: 64 MiB) with headroom."""
    try:
        cap = getattr(pltpu.get_tpu_info(), "vmem_capacity_bytes", default_cap)
    except Exception:
        cap = default_cap
    return int(cap * frac)


# ---------------------------------------------------------------------------
# Kernel A: LayerNorm1 -> multi-head self-attention (+ padding mask) -> residual
# One grid step per batch element; projection weights (bf16) stay resident.
# ---------------------------------------------------------------------------
def _make_attn_kernel(num_heads, head_dim, scale):
    def kernel(x_ref, mask_ref, g_ref, b_ref, wqkv_ref, bqkv_ref, wo_ref, bo_ref,
               o_ref):
        x = x_ref[0].astype(jnp.float32)                       # (S, D)
        # LayerNorm1
        mu = jnp.mean(x, axis=-1, keepdims=True)
        xc = x - mu
        var = jnp.mean(xc * xc, axis=-1, keepdims=True)
        ln = xc * jax.lax.rsqrt(var + LN_EPS) * g_ref[...] + b_ref[...]
        # Fused qkv projection: bf16 operands on the MXU, f32 accumulation.
        qkv = jnp.dot(ln.astype(jnp.bfloat16), wqkv_ref[...],
                      preferred_element_type=jnp.float32)
        qkv = qkv + bqkv_ref[...]                              # (S, 3D) f32
        D = num_heads * head_dim
        q = qkv[:, :D].astype(jnp.bfloat16)
        k = qkv[:, D:2 * D].astype(jnp.bfloat16)
        v = qkv[:, 2 * D:].astype(jnp.bfloat16)
        # Hoisted additive mask bias: computed once, not once per head.
        mask = mask_ref[0]                                     # (1, S) key mask
        bias = jnp.where(mask > 0, -1e7, 0.0).astype(jnp.float32)
        # Per-head attention with static head offsets (static lane slices).
        # Contexts are concatenated and projected once with a K=D matmul
        # (full MXU occupancy instead of 8 K=head_dim dots).
        # TODO(synk): for long S, tile over KV blocks (flash-style online softmax)
        # so the full (S, S) scores never materialize; fine at demo sizes.
        ctx = []
        for h in range(num_heads):
            s0 = h * head_dim
            s1 = s0 + head_dim
            scores = jax.lax.dot_general(
                q[:, s0:s1], k[:, s0:s1], (((1,), (1,)), ((), ())),
                preferred_element_type=jnp.float32) * scale    # (S, S)
            probs = jax.nn.softmax(scores + bias, axis=-1)
            # TODO(synk): attention dropout (att_drop=0 / eval) is identity; skipped.
            ctx.append(jnp.dot(probs.astype(jnp.bfloat16), v[:, s0:s1],
                               preferred_element_type=jnp.float32))
        ctx = jnp.concatenate(ctx, axis=-1).astype(jnp.bfloat16)      # (S, D)
        proj = jnp.dot(ctx, wo_ref[...], preferred_element_type=jnp.float32)
        # TODO(synk): proj dropout / DropPath with p=0 (or eval) is identity; skipped.
        out = x + proj + bo_ref[...]
        o_ref[0] = out.astype(o_ref.dtype)

    return kernel


def attention_block(x, padding_mask, gamma, beta, wqkv, bqkv, wo, bo, *, num_heads):
    B, S, D = x.shape
    head_dim = D // num_heads
    scale = head_dim ** -0.5
    mask3 = padding_mask.astype(jnp.float32).reshape(B, 1, S)
    kernel = _make_attn_kernel(num_heads, head_dim, scale)
    return pl.pallas_call(
        kernel,
        out_shape=jax.ShapeDtypeStruct((B, S, D), x.dtype),
        grid_spec=pltpu.PrefetchScalarGridSpec(
            num_scalar_prefetch=0,
            grid=(B,),
            in_specs=[
                pl.BlockSpec((1, S, D), lambda b: (b, 0, 0)),     # x
                pl.BlockSpec((1, 1, S), lambda b: (b, 0, 0)),     # padding mask
                pl.BlockSpec((1, D), lambda b: (0, 0)),           # ln1 gamma
                pl.BlockSpec((1, D), lambda b: (0, 0)),           # ln1 beta
                pl.BlockSpec((D, 3 * D), lambda b: (0, 0)),       # Wqkv (bf16, resident)
                pl.BlockSpec((1, 3 * D), lambda b: (0, 0)),       # bqkv
                pl.BlockSpec((D, D), lambda b: (0, 0)),           # Wo (bf16, resident)
                pl.BlockSpec((1, D), lambda b: (0, 0)),           # bo
            ],
            out_specs=pl.BlockSpec((1, S, D), lambda b: (b, 0, 0)),
        ),
        compiler_params=pltpu.CompilerParams(
            dimension_semantics=("parallel",),
            vmem_limit_bytes=_vmem_limit_bytes()),
    )(x, mask3, gamma.reshape(1, D), beta.reshape(1, D),
      wqkv.astype(jnp.bfloat16), bqkv.reshape(1, 3 * D),
      wo.astype(jnp.bfloat16), bo.reshape(1, D))


# ---------------------------------------------------------------------------
# Kernel B: LayerNorm2 -> fc1 -> GELU -> fc2 -> residual
# Grid: (M tiles, H tiles).  H is a reduction axis with an f32 accumulator;
# by default tile_h = H so the bf16 weights are resident and the H axis is one
# step (weights DMA'd once).
# ---------------------------------------------------------------------------
def mlp_block_kernel(x_ref, g_ref, b_ref, w1_ref, b1_ref, w2_ref, b2_ref, o_ref,
                     ln_scratch, acc_ref):
    hstep = pl.program_id(1)

    @pl.when(hstep == 0)
    def _():
        x = x_ref[...].astype(jnp.float32)
        mu = jnp.mean(x, axis=-1, keepdims=True)
        xc = x - mu
        var = jnp.mean(xc * xc, axis=-1, keepdims=True)
        ln = xc * jax.lax.rsqrt(var + LN_EPS) * g_ref[...] + b_ref[...]
        # bf16 operands feed the MXU at full rate; accumulation stays f32.
        ln_scratch[...] = ln.astype(jnp.bfloat16)
        acc_ref[...] = jnp.zeros_like(acc_ref)

    h = jnp.dot(ln_scratch[...], w1_ref[...], preferred_element_type=jnp.float32)
    h = h + b1_ref[...]
    h = jax.nn.gelu(h, approximate=False)      # exact erf, matches torch default
    # TODO(synk): dropout with p=0 (or eval mode) is identity; skipped.
    acc_ref[...] += jnp.dot(h.astype(jnp.bfloat16), w2_ref[...],
                            preferred_element_type=jnp.float32)

    @pl.when(hstep == pl.num_programs(1) - 1)
    def _():
        out = x_ref[...].astype(jnp.float32) + acc_ref[...] + b2_ref[...]
        o_ref[...] = out.astype(o_ref.dtype)


def ln_mlp_residual(x2d, gamma, beta, w1, b1, w2, b2, *, tile_m=512, tile_h=None):
    M, D = x2d.shape
    H = w1.shape[1]
    O = w2.shape[1]
    # Large M tile amortizes per-step overhead; clamp + zero-pad the tail.
    tile_m = min(tile_m, _round_up(M, 8))
    M_pad = _round_up(M, tile_m)
    if M_pad != M:
        x2d = jnp.pad(x2d, ((0, M_pad - M), (0, 0)))
    # Default: W1/W2 fully resident (tile_h = H) -> single H step, weights fetched
    # once (v5e/v6e).  An H split (multiple of 128 that divides H) may be requested
    # for v7x's smaller VMEM; invalid requests fall back to resident weights.
    if tile_h is None or tile_h >= H or H % tile_h != 0 or tile_h % 128 != 0:
        tile_h = H
    grid = (M_pad // tile_m, H // tile_h)
    num_m_tiles = grid[0]

    # Weights are re-streamed once per M tile only when the H axis is split
    # (the W1/W2 block index changes every j step); otherwise they load once.
    weight_bytes = 2 * (D * H + H * O)                         # bf16 weights
    weight_traffic = weight_bytes * (num_m_tiles if grid[1] > 1 else 1)
    cost = pl.CostEstimate(
        flops=2 * M_pad * (D * H + H * O),
        transcendentals=M_pad * H,
        bytes_accessed=4 * M_pad * (D + O) + weight_traffic + 4 * (2 * D + H + O))

    # NOTE: if the H split is kept (v7x), consider pipeline_mode=pl.Buffered(3)
    # on the W1/W2 specs to hide the per-step weight DMA (sweep 2 vs 3).
    out = pl.pallas_call(
        mlp_block_kernel,
        out_shape=jax.ShapeDtypeStruct((M_pad, O), x2d.dtype),
        grid_spec=pltpu.PrefetchScalarGridSpec(
            num_scalar_prefetch=0,
            grid=grid,
            in_specs=[
                pl.BlockSpec((tile_m, D), lambda i, j: (i, 0)),   # x tile
                pl.BlockSpec((1, D), lambda i, j: (0, 0)),        # ln2 gamma
                pl.BlockSpec((1, D), lambda i, j: (0, 0)),        # ln2 beta
                pl.BlockSpec((D, tile_h), lambda i, j: (0, j)),   # W1 slice (bf16)
                pl.BlockSpec((1, tile_h), lambda i, j: (0, j)),   # b1 slice
                pl.BlockSpec((tile_h, O), lambda i, j: (j, 0)),   # W2 slice (bf16)
                pl.BlockSpec((1, O), lambda i, j: (0, 0)),        # b2
            ],
            out_specs=pl.BlockSpec((tile_m, O), lambda i, j: (i, 0)),
            scratch_shapes=[pltpu.VMEM((tile_m, D), jnp.bfloat16),
                            pltpu.VMEM((tile_m, O), jnp.float32)],
        ),
        compiler_params=pltpu.CompilerParams(
            dimension_semantics=("parallel", "arbitrary"),
            vmem_limit_bytes=_vmem_limit_bytes()),
        cost_estimate=cost,
    )(x2d, gamma.reshape(1, D), beta.reshape(1, D),
      w1.astype(jnp.bfloat16), b1.reshape(1, H),
      w2.astype(jnp.bfloat16), b2.reshape(1, O))
    return out[:M]


# ---------------------------------------------------------------------------
# Full Block forward
# ---------------------------------------------------------------------------
def block_forward(x, params, padding_mask=None, *, num_heads=8,
                  tile_m=512, tile_h=None):
    B, S, D = x.shape
    if padding_mask is None:
        padding_mask = jnp.zeros((B, S), jnp.float32)
    x_attn = attention_block(
        x, padding_mask,
        params["ln1_g"], params["ln1_b"],
        params["wqkv"], params["bqkv"], params["wo"], params["bo"],
        num_heads=num_heads)
    out2d = ln_mlp_residual(
        x_attn.reshape(B * S, D),
        params["ln2_g"], params["ln2_b"],
        params["w1"], params["b1"], params["w2"], params["b2"],
        tile_m=tile_m, tile_h=tile_h)
    return out2d.reshape(B, S, D)


# ---------------------------------------------------------------------------
# Pure-JAX reference (f32) for correctness checking
# ---------------------------------------------------------------------------
def block_ref(x, params, padding_mask, num_heads):
    B, S, D = x.shape
    hd = D // num_heads
    scale = hd ** -0.5

    def ln(z, g, b):
        mu = jnp.mean(z, -1, keepdims=True)
        zc = z - mu
        var = jnp.mean(zc * zc, -1, keepdims=True)
        return zc * jax.lax.rsqrt(var + LN_EPS) * g + b

    h1 = ln(x, params["ln1_g"], params["ln1_b"])
    qkv = h1 @ params["wqkv"] + params["bqkv"]
    qkv = qkv.reshape(B, S, 3, num_heads, hd).transpose(2, 0, 3, 1, 4)
    q, k, v = qkv[0], qkv[1], qkv[2]                     # (B, nh, S, hd)
    att = jnp.einsum("bhqd,bhkd->bhqk", q, k) * scale
    att = jnp.where(padding_mask[:, None, None, :] > 0, -1e7, att)
    att = jax.nn.softmax(att, axis=-1)
    o = jnp.einsum("bhqk,bhkd->bhqd", att, v)
    o = o.transpose(0, 2, 1, 3).reshape(B, S, D)
    o = o @ params["wo"] + params["bo"]
    x = x + o
    h2 = ln(x, params["ln2_g"], params["ln2_b"])
    z = jax.nn.gelu(h2 @ params["w1"] + params["b1"], approximate=False)
    z = z @ params["w2"] + params["b2"]
    return x + z


if __name__ == "__main__":
    B, S, D = 2, 8, 128
    num_heads = 8
    H = 4 * D

    key = jax.random.PRNGKey(0)
    ks = jax.random.split(key, 12)

    def xavier(k, fin, fout):
        lim = math.sqrt(6.0 / (fin + fout))
        return jax.random.uniform(k, (fin, fout), jnp.float32, -lim, lim)

    params = {
        "ln1_g": 1.0 + 0.1 * jax.random.normal(ks[0], (D,), jnp.float32),
        "ln1_b": 0.1 * jax.random.normal(ks[1], (D,), jnp.float32),
        "wqkv": xavier(ks[2], D, 3 * D),
        "bqkv": 0.02 * jax.random.normal(ks[3], (3 * D,), jnp.float32),
        "wo": xavier(ks[4], D, D),
        "bo": 0.02 * jax.random.normal(ks[5], (D,), jnp.float32),
        "ln2_g": 1.0 + 0.1 * jax.random.normal(ks[6], (D,), jnp.float32),
        "ln2_b": 0.1 * jax.random.normal(ks[7], (D,), jnp.float32),
        "w1": xavier(ks[8], D, H),
        "b1": 0.02 * jax.random.normal(ks[9], (H,), jnp.float32),
        "w2": xavier(ks[10], H, D),
        "b2": 0.02 * jax.random.normal(ks[11], (D,), jnp.float32),
    }
    x = jax.random.normal(jax.random.PRNGKey(42), (B, S, D), jnp.float32)
    # mark the last two positions of each sequence as padding (mask > 0 => masked)
    padding_mask = jnp.zeros((B, S), jnp.float32).at[:, -2:].set(1.0)

    out = block_forward(x, params, padding_mask, num_heads=num_heads)
    out = jax.block_until_ready(out)

    ref = block_ref(x, params, padding_mask, num_heads)
    assert out.shape == (B, S, D)
    # bf16 MXU operands (f32 accumulation) in both kernels -> loosened tolerance
    assert jnp.allclose(out, ref, atol=5e-2, rtol=5e-2), (
        float(jnp.max(jnp.abs(out - ref))))

    print("KERNEL_OK")
</pallas_src>

<mosaic_0001>
module attributes {stable_mosaic.version = 11 : i64} {
  func.func @kernel(%arg0: i32, %arg1: memref<1x8x128xf32, #tpu.memory_space<vmem>>, %arg2: memref<1x1x8xf32, #tpu.memory_space<vmem>>, %arg3: memref<1x128xf32, #tpu.memory_space<vmem>>, %arg4: memref<1x128xf32, #tpu.memory_space<vmem>>, %arg5: memref<128x384xbf16, #tpu.memory_space<vmem>>, %arg6: memref<1x384xf32, #tpu.memory_space<vmem>>, %arg7: memref<128x128xbf16, #tpu.memory_space<vmem>>, %arg8: memref<1x128xf32, #tpu.memory_space<vmem>>, %arg9: memref<1x8x128xf32, #tpu.memory_space<vmem>>) attributes {dimension_semantics = [#tpu.dimension_semantics<parallel>], iteration_bounds = array<i64: 2>, scalar_prefetch = 0 : i64, scratch_operands = 0 : i64, tpu.core_type = #tpu.core_type<tc>, window_params = [{transform_indices = @transform_0, window_bounds = array<i64: 1, 8, 128>}, {transform_indices = @transform_1, window_bounds = array<i64: 1, 1, 8>}, {pipeline_mode = #tpu.pipeline_mode<synchronous>, transform_indices = @transform_2, window_bounds = array<i64: 1, 128>}, {pipeline_mode = #tpu.pipeline_mode<synchronous>, transform_indices = @transform_3, window_bounds = array<i64: 1, 128>}, {pipeline_mode = #tpu.pipeline_mode<synchronous>, transform_indices = @transform_4, window_bounds = array<i64: 128, 384>}, {pipeline_mode = #tpu.pipeline_mode<synchronous>, transform_indices = @transform_5, window_bounds = array<i64: 1, 384>}, {pipeline_mode = #tpu.pipeline_mode<synchronous>, transform_indices = @transform_6, window_bounds = array<i64: 128, 128>}, {pipeline_mode = #tpu.pipeline_mode<synchronous>, transform_indices = @transform_7, window_bounds = array<i64: 1, 128>}, {transform_indices = @transform_8, window_bounds = array<i64: 1, 8, 128>}]} {
    %c0 = arith.constant 0 : index
    %c0_0 = arith.constant 0 : index
    %c0_1 = arith.constant 0 : index
    %0 = vector.load %arg1[%c0, %c0_0, %c0_1] : memref<1x8x128xf32, #tpu.memory_space<vmem>>, vector<1x8x128xf32>
    %1 = vector.shape_cast %0 : vector<1x8x128xf32> to vector<8x128xf32>
    %cst = arith.constant dense<0.000000e+00> : vector<8xf32>
    %2 = vector.multi_reduction <add>, %1, %cst [1] : vector<8x128xf32> to vector<8xf32>
    %3 = vector.shape_cast %2 : vector<8xf32> to vector<8x1xf32>
    %cst_2 = arith.constant 1.280000e+02 : f32
    %4 = vector.broadcast %cst_2 : f32 to vector<8x1xf32>
    %5 = arith.divf %3, %4 : vector<8x1xf32>
    %6 = vector.broadcast %5 : vector<8x1xf32> to vector<8x128xf32>
    %7 = arith.subf %1, %6 : vector<8x128xf32>
    %8 = arith.mulf %7, %7 : vector<8x128xf32>
    %cst_3 = arith.constant dense<0.000000e+00> : vector<8xf32>
    %9 = vector.multi_reduction <add>, %8, %cst_3 [1] : vector<8x128xf32> to vector<8xf32>
    %10 = vector.shape_cast %9 : vector<8xf32> to vector<8x1xf32>
    %cst_4 = arith.constant 1.280000e+02 : f32
    %11 = vector.broadcast %cst_4 : f32 to vector<8x1xf32>
    %12 = arith.divf %10, %11 : vector<8x1xf32>
    %cst_5 = arith.constant 9.99999974E-6 : f32
    %13 = vector.broadcast %cst_5 : f32 to vector<8x1xf32>
    %14 = arith.addf %12, %13 : vector<8x1xf32>
    %15 = math.rsqrt %14 : vector<8x1xf32>
    %16 = vector.broadcast %15 : vector<8x1xf32> to vector<8x128xf32>
    %17 = arith.mulf %7, %16 : vector<8x128xf32>
    %c0_6 = arith.constant 0 : index
    %c0_7 = arith.constant 0 : index
    %18 = vector.load %arg3[%c0_6, %c0_7] : memref<1x128xf32, #tpu.memory_space<vmem>>, vector<1x128xf32>
    %19 = vector.broadcast %18 : vector<1x128xf32> to vector<8x128xf32>
    %20 = arith.mulf %17, %19 : vector<8x128xf32>
    %c0_8 = arith.constant 0 : index
    %c0_9 = arith.constant 0 : index
    %21 = vector.load %arg4[%c0_8, %c0_9] : memref<1x128xf32, #tpu.memory_space<vmem>>, vector<1x128xf32>
    %22 = vector.broadcast %21 : vector<1x128xf32> to vector<8x128xf32>
    %23 = arith.addf %20, %22 : vector<8x128xf32>
    %24 = arith.truncf %23 : vector<8x128xf32> to vector<8x128xbf16>
    %c0_10 = arith.constant 0 : index
    %c0_11 = arith.constant 0 : index
    %25 = vector.load %arg5[%c0_10, %c0_11] : memref<128x384xbf16, #tpu.memory_space<vmem>>, vector<128x384xbf16>
    %cst_12 = arith.constant dense<0.000000e+00> : vector<8x384xf32>
    %26 = tpu.matmul %24, %25, %cst_12 {dimension_numbers = #tpu.dot_dimension_numbers<[1], [0], [0], [1], [0, 0, 1, 1], [], []>} : vector<8x128xbf16>, vector<128x384xbf16>, vector<8x384xf32> -> vector<8x384xf32>
    %c0_13 = arith.constant 0 : index
    %c0_14 = arith.constant 0 : index
    %27 = vector.load %arg6[%c0_13, %c0_14] : memref<1x384xf32, #tpu.memory_space<vmem>>, vector<1x384xf32>
    %28 = vector.broadcast %27 : vector<1x384xf32> to vector<8x384xf32>
    %29 = arith.addf %26, %28 : vector<8x384xf32>
    %30 = vector.extract_strided_slice %29 {offsets = [0, 0], sizes = [8, 128], strides = [1, 1]} : vector<8x384xf32> to vector<8x128xf32>
    %31 = arith.truncf %30 : vector<8x128xf32> to vector<8x128xbf16>
    %32 = vector.extract_strided_slice %29 {offsets = [0, 128], sizes = [8, 128], strides = [1, 1]} : vector<8x384xf32> to vector<8x128xf32>
    %33 = arith.truncf %32 : vector<8x128xf32> to vector<8x128xbf16>
    %34 = vector.extract_strided_slice %29 {offsets = [0, 256], sizes = [8, 128], strides = [1, 1]} : vector<8x384xf32> to vector<8x128xf32>
    %35 = arith.truncf %34 : vector<8x128xf32> to vector<8x128xbf16>
    %c0_15 = arith.constant 0 : index
    %c0_16 = arith.constant 0 : index
    %c0_17 = arith.constant 0 : index
    %36 = vector.load %arg2[%c0_15, %c0_16, %c0_17] : memref<1x1x8xf32, #tpu.memory_space<vmem>>, vector<1x1x8xf32>
    %37 = vector.shape_cast %36 : vector<1x1x8xf32> to vector<1x8xf32>
    %cst_18 = arith.constant 0.000000e+00 : f32
    %38 = vector.broadcast %cst_18 : f32 to vector<1x8xf32>
    %39 = arith.cmpf ogt, %37, %38 : vector<1x8xf32>
    %cst_19 = arith.constant -1.000000e+07 : f32
    %cst_20 = arith.constant 0.000000e+00 : f32
    %40 = vector.broadcast %cst_19 : f32 to vector<1x8xf32>
    %41 = vector.broadcast %cst_20 : f32 to vector<1x8xf32>
    %42 = arith.select %39, %40, %41 : vector<1x8xi1>, vector<1x8xf32>
    %43 = vector.extract_strided_slice %31 {offsets = [0, 0], sizes = [8, 16], strides = [1, 1]} : vector<8x128xbf16> to vector<8x16xbf16>
    %44 = vector.extract_strided_slice %33 {offsets = [0, 0], sizes = [8, 16], strides = [1, 1]} : vector<8x128xbf16> to vector<8x16xbf16>
    %cst_21 = arith.constant dense<0.000000e+00> : vector<8x8xf32>
    %45 = tpu.matmul %43, %44, %cst_21 {dimension_numbers = #tpu.dot_dimension_numbers<[1], [1], [0], [0], [0, 0, 1, 0], [], []>} : vector<8x16xbf16>, vector<8x16xbf16>, vector<8x8xf32> -> vector<8x8xf32>
    %cst_22 = arith.constant 2.500000e-01 : f32
    %46 = vector.broadcast %cst_22 : f32 to vector<8x8xf32>
    %47 = arith.mulf %45, %46 : vector<8x8xf32>
    %48 = vector.broadcast %42 : vector<1x8xf32> to vector<8x8xf32>
    %49 = arith.addf %47, %48 : vector<8x8xf32>
    %cst_23 = arith.constant dense<0xFF800000> : vector<8xf32>
    %50 = vector.multi_reduction <maximumf>, %49, %cst_23 [1] : vector<8x8xf32> to vector<8xf32>
    %cst_24 = arith.constant 0xFF800000 : f32
    %51 = vector.broadcast %cst_24 : f32 to vector<8xf32>
    %52 = arith.maximumf %51, %50 : vector<8xf32>
    %53 = vector.shape_cast %52 : vector<8xf32> to vector<8x1xf32>
    %54 = vector.broadcast %53 : vector<8x1xf32> to vector<8x8xf32>
    %55 = arith.subf %49, %54 : vector<8x8xf32>
    %56 = math.exp %55 : vector<8x8xf32>
    %cst_25 = arith.constant dense<0.000000e+00> : vector<8xf32>
    %57 = vector.multi_reduction <add>, %56, %cst_25 [1] : vector<8x8xf32> to vector<8xf32>
    %58 = vector.shape_cast %57 : vector<8xf32> to vector<8x1xf32>
    %59 = vector.broadcast %58 : vector<8x1xf32> to vector<8x8xf32>
    %60 = arith.divf %56, %59 : vector<8x8xf32>
    %61 = arith.truncf %60 : vector<8x8xf32> to vector<8x8xbf16>
    %62 = vector.extract_strided_slice %35 {offsets = [0, 0], sizes = [8, 16], strides = [1, 1]} : vector<8x128xbf16> to vector<8x16xbf16>
    %cst_26 = arith.constant dense<0.000000e+00> : vector<8x16xf32>
    %63 = tpu.matmul %61, %62, %cst_26 {dimension_numbers = #tpu.dot_dimension_numbers<[1], [0], [0], [1], [0, 0, 1, 1], [], []>} : vector<8x8xbf16>, vector<8x16xbf16>, vector<8x16xf32> -> vector<8x16xf32>
    %64 = vector.extract_strided_slice %31 {offsets = [0, 16], sizes = [8, 16], strides = [1, 1]} : vector<8x128xbf16> to vector<8x16xbf16>
    %65 = vector.extract_strided_slice %33 {offsets = [0, 16], sizes = [8, 16], strides = [1, 1]} : vector<8x128xbf16> to vector<8x16xbf16>
    %cst_27 = arith.constant dense<0.000000e+00> : vector<8x8xf32>
    %66 = tpu.matmul %64, %65, %cst_27 {dimension_numbers = #tpu.dot_dimension_numbers<[1], [1], [0], [0], [0, 0, 1, 0], [], []>} : vector<8x16xbf16>, vector<8x16xbf16>, vector<8x8xf32> -> vector<8x8xf32>
    %cst_28 = arith.constant 2.500000e-01 : f32
    %67 = vector.broadcast %cst_28 : f32 to vector<8x8xf32>
    %68 = arith.mulf %66, %67 : vector<8x8xf32>
    %69 = vector.broadcast %42 : vector<1x8xf32> to vector<8x8xf32>
    %70 = arith.addf %68, %69 : vector<8x8xf32>
    %cst_29 = arith.constant dense<0xFF800000> : vector<8xf32>
    %71 = vector.multi_reduction <maximumf>, %70, %cst_29 [1] : vector<8x8xf32> to vector<8xf32>
    %cst_30 = arith.constant 0xFF800000 : f32
    %72 = vector.broadcast %cst_30 : f32 to vector<8xf32>
    %73 = arith.maximumf %72, %71 : vector<8xf32>
    %74 = vector.shape_cast %73 : vector<8xf32> to vector<8x1xf32>
    %75 = vector.broadcast %74 : vector<8x1xf32> to vector<8x8xf32>
    %76 = arith.subf %70, %75 : vector<8x8xf32>
    %77 = math.exp %76 : vector<8x8xf32>
    %cst_31 = arith.constant dense<0.000000e+00> : vector<8xf32>
    %78 = vector.multi_reduction <add>, %77, %cst_31 [1] : vector<8x8xf32> to vector<8xf32>
    %79 = vector.shape_cast %78 : vector<8xf32> to vector<8x1xf32>
    %80 = vector.broadcast %79 : vector<8x1xf32> to vector<8x8xf32>
    %81 = arith.divf %77, %80 : vector<8x8xf32>
    %82 = arith.truncf %81 : vector<8x8xf32> to vector<8x8xbf16>
    %83 = vector.extract_strided_slice %35 {offsets = [0, 16], sizes = [8, 16], strides = [1, 1]} : vector<8x128xbf16> to vector<8x16xbf16>
    %cst_32 = arith.constant dense<0.000000e+00> : vector<8x16xf32>
    %84 = tpu.matmul %82, %83, %cst_32 {dimension_numbers = #tpu.dot_dimension_numbers<[1], [0], [0], [1], [0, 0, 1, 1], [], []>} : vector<8x8xbf16>, vector<8x16xbf16>, vector<8x16xf32> -> vector<8x16xf32>
    %85 = vector.extract_strided_slice %31 {offsets = [0, 32], sizes = [8, 16], strides = [1, 1]} : vector<8x128xbf16> to vector<8x16xbf16>
    %86 = vector.extract_strided_slice %33 {offsets = [0, 32], sizes = [8, 16], strides = [1, 1]} : vector<8x128xbf16> to vector<8x16xbf16>
    %cst_33 = arith.constant dense<0.000000e+00> : vector<8x8xf32>
    %87 = tpu.matmul %85, %86, %cst_33 {dimension_numbers = #tpu.dot_dimension_numbers<[1], [1], [0], [0], [0, 0, 1, 0], [], []>} : vector<8x16xbf16>, vector<8x16xbf16>, vector<8x8xf32> -> vector<8x8xf32>
    %cst_34 = arith.constant 2.500000e-01 : f32
    %88 = vector.broadcast %cst_34 : f32 to vector<8x8xf32>
    %89 = arith.mulf %87, %88 : vector<8x8xf32>
    %90 = vector.broadcast %42 : vector<1x8xf32> to vector<8x8xf32>
    %91 = arith.addf %89, %90 : vector<8x8xf32>
    %cst_35 = arith.constant dense<0xFF800000> : vector<8xf32>
    %92 = vector.multi_reduction <maximumf>, %91, %cst_35 [1] : vector<8x8xf32> to vector<8xf32>
    %cst_36 = arith.constant 0xFF800000 : f32
    %93 = vector.broadcast %cst_36 : f32 to vector<8xf32>
    %94 = arith.maximumf %93, %92 : vector<8xf32>
    %95 = vector.shape_cast %94 : vector<8xf32> to vector<8x1xf32>
    %96 = vector.broadcast %95 : vector<8x1xf32> to vector<8x8xf32>
    %97 = arith.subf %91, %96 : vector<8x8xf32>
    %98 = math.exp %97 : vector<8x8xf32>
    %cst_37 = arith.constant dense<0.000000e+00> : vector<8xf32>
    %99 = vector.multi_reduction <add>, %98, %cst_37 [1] : vector<8x8xf32> to vector<8xf32>
    %100 = vector.shape_cast %99 : vector<8xf32> to vector<8x1xf32>
    %101 = vector.broadcast %100 : vector<8x1xf32> to vector<8x8xf32>
    %102 = arith.divf %98, %101 : vector<8x8xf32>
    %103 = arith.truncf %102 : vector<8x8xf32> to vector<8x8xbf16>
    %104 = vector.extract_strided_slice %35 {offsets = [0, 32], sizes = [8, 16], strides = [1, 1]} : vector<8x128xbf16> to vector<8x16xbf16>
    %cst_38 = arith.constant dense<0.000000e+00> : vector<8x16xf32>
    %105 = tpu.matmul %103, %104, %cst_38 {dimension_numbers = #tpu.dot_dimension_numbers<[1], [0], [0], [1], [0, 0, 1, 1], [], []>} : vector<8x8xbf16>, vector<8x16xbf16>, vector<8x16xf32> -> vector<8x16xf32>
    %106 = vector.extract_strided_slice %31 {offsets = [0, 48], sizes = [8, 16], strides = [1, 1]} : vector<8x128xbf16> to vector<8x16xbf16>
    %107 = vector.extract_strided_slice %33 {offsets = [0, 48], sizes = [8, 16], strides = [1, 1]} : vector<8x128xbf16> to vector<8x16xbf16>
    %cst_39 = arith.constant dense<0.000000e+00> : vector<8x8xf32>
    %108 = tpu.matmul %106, %107, %cst_39 {dimension_numbers = #tpu.dot_dimension_numbers<[1], [1], [0], [0], [0, 0, 1, 0], [], []>} : vector<8x16xbf16>, vector<8x16xbf16>, vector<8x8xf32> -> vector<8x8xf32>
    %cst_40 = arith.constant 2.500000e-01 : f32
    %109 = vector.broadcast %cst_40 : f32 to vector<8x8xf32>
    %110 = arith.mulf %108, %109 : vector<8x8xf32>
    %111 = vector.broadcast %42 : vector<1x8xf32> to vector<8x8xf32>
    %112 = arith.addf %110, %111 : vector<8x8xf32>
    %cst_41 = arith.constant dense<0xFF800000> : vector<8xf32>
    %113 = vector.multi_reduction <maximumf>, %112, %cst_41 [1] : vector<8x8xf32> to vector<8xf32>
    %cst_42 = arith.constant 0xFF800000 : f32
    %114 = vector.broadcast %cst_42 : f32 to vector<8xf32>
    %115 = arith.maximumf %114, %113 : vector<8xf32>
    %116 = vector.shape_cast %115 : vector<8xf32> to vector<8x1xf32>
    %117 = vector.broadcast %116 : vector<8x1xf32> to vector<8x8xf32>
    %118 = arith.subf %112, %117 : vector<8x8xf32>
    %119 = math.exp %118 : vector<8x8xf32>
    %cst_43 = arith.constant dense<0.000000e+00> : vector<8xf32>
    %120 = vector.multi_reduction <add>, %119, %cst_43 [1] : vector<8x8xf32> to vector<8xf32>
    %121 = vector.shape_cast %120 : vector<8xf32> to vector<8x1xf32>
    %122 = vector.broadcast %121 : vector<8x1xf32> to vector<8x8xf32>
    %123 = arith.divf %119, %122 : vector<8x8xf32>
    %124 = arith.truncf %123 : vector<8x8xf32> to vector<8x8xbf16>
    %125 = vector.extract_strided_slice %35 {offsets = [0, 48], sizes = [8, 16], strides = [1, 1]} : vector<8x128xbf16> to vector<8x16xbf16>
    %cst_44 = arith.constant dense<0.000000e+00> : vector<8x16xf32>
    %126 = tpu.matmul %124, %125, %cst_44 {dimension_numbers = #tpu.dot_dimension_numbers<[1], [0], [0], [1], [0, 0, 1, 1], [], []>} : vector<8x8xbf16>, vector<8x16xbf16>, vector<8x16xf32> -> vector<8x16xf32>
    %127 = vector.extract_strided_slice %31 {offsets = [0, 64], sizes = [8, 16], strides = [1, 1]} : vector<8x128xbf16> to vector<8x16xbf16>
    %128 = vector.extract_strided_slice %33 {offsets = [0, 64], sizes = [8, 16], strides = [1, 1]} : vector<8x128xbf16> to vector<8x16xbf16>
    %cst_45 = arith.constant dense<0.000000e+00> : vector<8x8xf32>
    %129 = tpu.matmul %127, %128, %cst_45 {dimension_numbers = #tpu.dot_dimension_numbers<[1], [1], [0], [0], [0, 0, 1, 0], [], []>} : vector<8x16xbf16>, vector<8x16xbf16>, vector<8x8xf32> -> vector<8x8xf32>
    %cst_46 = arith.constant 2.500000e-01 : f32
    %130 = vector.broadcast %cst_46 : f32 to vector<8x8xf32>
    %131 = arith.mulf %129, %130 : vector<8x8xf32>
    %132 = vector.broadcast %42 : vector<1x8xf32> to vector<8x8xf32>
    %133 = arith.addf %131, %132 : vector<8x8xf32>
    %cst_47 = arith.constant dense<0xFF800000> : vector<8xf32>
    %134 = vector.multi_reduction <maximumf>, %133, %cst_47 [1] : vector<8x8xf32> to vector<8xf32>
    %cst_48 = arith.constant 0xFF800000 : f32
    %135 = vector.broadcast %cst_48 : f32 to vector<8xf32>
    %136 = arith.maximumf %135, %134 : vector<8xf32>
    %137 = vector.shape_cast %136 : vector<8xf32> to vector<8x1xf32>
    %138 = vector.broadcast %137 : vector<8x1xf32> to vector<8x8xf32>
    %139 = arith.subf %133, %138 : vector<8x8xf32>
    %140 = math.exp %139 : vector<8x8xf32>
    %cst_49 = arith.constant dense<0.000000e+00> : vector<8xf32>
    %141 = vector.multi_reduction <add>, %140, %cst_49 [1] : vector<8x8xf32> to vector<8xf32>
    %142 = vector.shape_cast %141 : vector<8xf32> to vector<8x1xf32>
    %143 = vector.broadcast %142 : vector<8x1xf32> to vector<8x8xf32>
    %144 = arith.divf %140, %143 : vector<8x8xf32>
    %145 = arith.truncf %144 : vector<8x8xf32> to vector<8x8xbf16>
    %146 = vector.extract_strided_slice %35 {offsets = [0, 64], sizes = [8, 16], strides = [1, 1]} : vector<8x128xbf16> to vector<8x16xbf16>
    %cst_50 = arith.constant dense<0.000000e+00> : vector<8x16xf32>
    %147 = tpu.matmul %145, %146, %cst_50 {dimension_numbers = #tpu.dot_dimension_numbers<[1], [0], [0], [1], [0, 0, 1, 1], [], []>} : vector<8x8xbf16>, vector<8x16xbf16>, vector<8x16xf32> -> vector<8x16xf32>
    %148 = vector.extract_strided_slice %31 {offsets = [0, 80], sizes = [8, 16], strides = [1, 1]} : vector<8x128xbf16> to vector<8x16xbf16>
    %149 = vector.extract_strided_slice %33 {offsets = [0, 80], sizes = [8, 16], strides = [1, 1]} : vector<8x128xbf16> to vector<8x16xbf16>
    %cst_51 = arith.constant dense<0.000000e+00> : vector<8x8xf32>
    %150 = tpu.matmul %148, %149, %cst_51 {dimension_numbers = #tpu.dot_dimension_numbers<[1], [1], [0], [0], [0, 0, 1, 0], [], []>} : vector<8x16xbf16>, vector<8x16xbf16>, vector<8x8xf32> -> vector<8x8xf32>
    %cst_52 = arith.constant 2.500000e-01 : f32
    %151 = vector.broadcast %cst_52 : f32 to vector<8x8xf32>
    %152 = arith.mulf %150, %151 : vector<8x8xf32>
    %153 = vector.broadcast %42 : vector<1x8xf32> to vector<8x8xf32>
    %154 = arith.addf %152, %153 : vector<8x8xf32>
    %cst_53 = arith.constant dense<0xFF800000> : vector<8xf32>
    %155 = vector.multi_reduction <maximumf>, %154, %cst_53 [1] : vector<8x8xf32> to vector<8xf32>
    %cst_54 = arith.constant 0xFF800000 : f32
    %156 = vector.broadcast %cst_54 : f32 to vector<8xf32>
    %157 = arith.maximumf %156, %155 : vector<8xf32>
    %158 = vector.shape_cast %157 : vector<8xf32> to vector<8x1xf32>
    %159 = vector.broadcast %158 : vector<8x1xf32> to vector<8x8xf32>
    %160 = arith.subf %154, %159 : vector<8x8xf32>
    %161 = math.exp %160 : vector<8x8xf32>
    %cst_55 = arith.constant dense<0.000000e+00> : vector<8xf32>
    %162 = vector.multi_reduction <add>, %161, %cst_55 [1] : vector<8x8xf32> to vector<8xf32>
    %163 = vector.shape_cast %162 : vector<8xf32> to vector<8x1xf32>
    %164 = vector.broadcast %163 : vector<8x1xf32> to vector<8x8xf32>
    %165 = arith.divf %161, %164 : vector<8x8xf32>
    %166 = arith.truncf %165 : vector<8x8xf32> to vector<8x8xbf16>
    %167 = vector.extract_strided_slice %35 {offsets = [0, 80], sizes = [8, 16], strides = [1, 1]} : vector<8x128xbf16> to vector<8x16xbf16>
    %cst_56 = arith.constant dense<0.000000e+00> : vector<8x16xf32>
    %168 = tpu.matmul %166, %167, %cst_56 {dimension_numbers = #tpu.dot_dimension_numbers<[1], [0], [0], [1], [0, 0, 1, 1], [], []>} : vector<8x8xbf16>, vector<8x16xbf16>, vector<8x16xf32> -> vector<8x16xf32>
    %169 = vector.extract_strided_slice %31 {offsets = [0, 96], sizes = [8, 16], strides = [1, 1]} : vector<8x128xbf16> to vector<8x16xbf16>
    %170 = vector.extract_strided_slice %33 {offsets = [0, 96], sizes = [8, 16], strides = [1, 1]} : vector<8x128xbf16> to vector<8x16xbf16>
    %cst_57 = arith.constant dense<0.000000e+00> : vector<8x8xf32>
    %171 = tpu.matmul %169, %170, %cst_57 {dimension_numbers = #tpu.dot_dimension_numbers<[1], [1], [0], [0], [0, 0, 1, 0], [], []>} : vector<8x16xbf16>, vector<8x16xbf16>, vector<8x8xf32> -> vector<8x8xf32>
    %cst_58 = arith.constant 2.500000e-01 : f32
    %172 = vector.broadcast %cst_58 : f32 to vector<8x8xf32>
    %173 = arith.mulf %171, %172 : vector<8x8xf32>
    %174 = vector.broadcast %42 : vector<1x8xf32> to vector<8x8xf32>
    %175 = arith.addf %173, %174 : vector<8x8xf32>
    %cst_59 = arith.constant dense<0xFF800000> : vector<8xf32>
    %176 = vector.multi_reduction <maximumf>, %175, %cst_59 [1] : vector<8x8xf32> to vector<8xf32>
    %cst_60 = arith.constant 0xFF800000 : f32
    %177 = vector.broadcast %cst_60 : f32 to vector<8xf32>
    %178 = arith.maximumf %177, %176 : vector<8xf32>
    %179 = vector.shape_cast %178 : vector<8xf32> to vector<8x1xf32>
    %180 = vector.broadcast %179 : vector<8x1xf32> to vector<8x8xf32>
    %181 = arith.subf %175, %180 : vector<8x8xf32>
    %182 = math.exp %181 : vector<8x8xf32>
    %cst_61 = arith.constant dense<0.000000e+00> : vector<8xf32>
    %183 = vector.multi_reduction <add>, %182, %cst_61 [1] : vector<8x8xf32> to vector<8xf32>
    %184 = vector.shape_cast %183 : vector<8xf32> to vector<8x1xf32>
    %185 = vector.broadcast %184 : vector<8x1xf32> to vector<8x8xf32>
    %186 = arith.divf %182, %185 : vector<8x8xf32>
    %187 = arith.truncf %186 : vector<8x8xf32> to vector<8x8xbf16>
    %188 = vector.extract_strided_slice %35 {offsets = [0, 96], sizes = [8, 16], strides = [1, 1]} : vector<8x128xbf16> to vector<8x16xbf16>
    %cst_62 = arith.constant dense<0.000000e+00> : vector<8x16xf32>
    %189 = tpu.matmul %187, %188, %cst_62 {dimension_numbers = #tpu.dot_dimension_numbers<[1], [0], [0], [1], [0, 0, 1, 1], [], []>} : vector<8x8xbf16>, vector<8x16xbf16>, vector<8x16xf32> -> vector<8x16xf32>
    %190 = vector.extract_strided_slice %31 {offsets = [0, 112], sizes = [8, 16], strides = [1, 1]} : vector<8x128xbf16> to vector<8x16xbf16>
    %191 = vector.extract_strided_slice %33 {offsets = [0, 112], sizes = [8, 16], strides = [1, 1]} : vector<8x128xbf16> to vector<8x16xbf16>
    %cst_63 = arith.constant dense<0.000000e+00> : vector<8x8xf32>
    %192 = tpu.matmul %190, %191, %cst_63 {dimension_numbers = #tpu.dot_dimension_numbers<[1], [1], [0], [0], [0, 0, 1, 0], [], []>} : vector<8x16xbf16>, vector<8x16xbf16>, vector<8x8xf32> -> vector<8x8xf32>
    %cst_64 = arith.constant 2.500000e-01 : f32
    %193 = vector.broadcast %cst_64 : f32 to vector<8x8xf32>
    %194 = arith.mulf %192, %193 : vector<8x8xf32>
    %195 = vector.broadcast %42 : vector<1x8xf32> to vector<8x8xf32>
    %196 = arith.addf %194, %195 : vector<8x8xf32>
    %cst_65 = arith.constant dense<0xFF800000> : vector<8xf32>
    %197 = vector.multi_reduction <maximumf>, %196, %cst_65 [1] : vector<8x8xf32> to vector<8xf32>
    %cst_66 = arith.constant 0xFF800000 : f32
    %198 = vector.broadcast %cst_66 : f32 to vector<8xf32>
    %199 = arith.maximumf %198, %197 : vector<8xf32>
    %200 = vector.shape_cast %199 : vector<8xf32> to vector<8x1xf32>
    %201 = vector.broadcast %200 : vector<8x1xf32> to vector<8x8xf32>
    %202 = arith.subf %196, %201 : vector<8x8xf32>
    %203 = math.exp %202 : vector<8x8xf32>
    %cst_67 = arith.constant dense<0.000000e+00> : vector<8xf32>
    %204 = vector.multi_reduction <add>, %203, %cst_67 [1] : vector<8x8xf32> to vector<8xf32>
    %205 = vector.shape_cast %204 : vector<8xf32> to vector<8x1xf32>
    %206 = vector.broadcast %205 : vector<8x1xf32> to vector<8x8xf32>
    %207 = arith.divf %203, %206 : vector<8x8xf32>
    %208 = arith.truncf %207 : vector<8x8xf32> to vector<8x8xbf16>
    %209 = vector.extract_strided_slice %35 {offsets = [0, 112], sizes = [8, 16], strides = [1, 1]} : vector<8x128xbf16> to vector<8x16xbf16>
    %cst_68 = arith.constant dense<0.000000e+00> : vector<8x16xf32>
    %210 = tpu.matmul %208, %209, %cst_68 {dimension_numbers = #tpu.dot_dimension_numbers<[1], [0], [0], [1], [0, 0, 1, 1], [], []>} : vector<8x8xbf16>, vector<8x16xbf16>, vector<8x16xf32> -> vector<8x16xf32>
    %211 = tpu.concatenate %63, %84, %105, %126, %147, %168, %189, %210 in 1 : vector<8x16xf32>, vector<8x16xf32>, vector<8x16xf32>, vector<8x16xf32>, vector<8x16xf32>, vector<8x16xf32>, vector<8x16xf32>, vector<8x16xf32> -> vector<8x128xf32>
    %212 = arith.truncf %211 : vector<8x128xf32> to vector<8x128xbf16>
    %c0_69 = arith.constant 0 : index
    %c0_70 = arith.constant 0 : index
    %213 = vector.load %arg7[%c0_69, %c0_70] : memref<128x128xbf16, #tpu.memory_space<vmem>>, vector<128x128xbf16>
    %cst_71 = arith.constant dense<0.000000e+00> : vector<8x128xf32>
    %214 = tpu.matmul %212, %213, %cst_71 {dimension_numbers = #tpu.dot_dimension_numbers<[1], [0], [0], [1], [0, 0, 1, 1], [], []>} : vector<8x128xbf16>, vector<128x128xbf16>, vector<8x128xf32> -> vector<8x128xf32>
    %215 = arith.addf %1, %214 : vector<8x128xf32>
    %c0_72 = arith.constant 0 : index
    %c0_73 = arith.constant 0 : index
    %216 = vector.load %arg8[%c0_72, %c0_73] : memref<1x128xf32, #tpu.memory_space<vmem>>, vector<1x128xf32>
    %217 = vector.broadcast %216 : vector<1x128xf32> to vector<8x128xf32>
    %218 = arith.addf %215, %217 : vector<8x128xf32>
    %c0_74 = arith.constant 0 : index
    %c0_75 = arith.constant 0 : index
    %c0_76 = arith.constant 0 : index
    %219 = vector.load %arg9[%c0_74, %c0_75, %c0_76] : memref<1x8x128xf32, #tpu.memory_space<vmem>>, vector<1x8x128xf32>
    %220 = vector.shape_cast %219 : vector<1x8x128xf32> to vector<8x128xf32>
    %221 = vector.shape_cast %218 : vector<8x128xf32> to vector<1x8x128xf32>
    tpu.vector_store %arg9[%c0_74, %c0_75, %c0_76], %221 {strides = array<i32>} : memref<1x8x128xf32, #tpu.memory_space<vmem>>, vector<1x8x128xf32>,
    return
  }
  func.func @transform_0(%arg0: i32) -> (i32, i32, i32) {
    %c0_i32 = arith.constant 0 : i32
    %c0_i32_0 = arith.constant 0 : i32
    %c0_i32_1 = arith.constant 0 : i32
    return %arg0, %c0_i32, %c0_i32_0 : i32, i32, i32
  }
  func.func @transform_1(%arg0: i32) -> (i32, i32, i32) {
    %c0_i32 = arith.constant 0 : i32
    %c0_i32_0 = arith.constant 0 : i32
    %c0_i32_1 = arith.constant 0 : i32
    return %arg0, %c0_i32, %c0_i32_0 : i32, i32, i32
  }
  func.func @transform_2(%arg0: i32) -> (i32, i32) {
    %c0_i32 = arith.constant 0 : i32
    %c0_i32_0 = arith.constant 0 : i32
    %c0_i32_1 = arith.constant 0 : i32
    return %c0_i32, %c0_i32_0 : i32, i32
  }
  func.func @transform_3(%arg0: i32) -> (i32, i32) {
    %c0_i32 = arith.constant 0 : i32
    %c0_i32_0 = arith.constant 0 : i32
    %c0_i32_1 = arith.constant 0 : i32
    return %c0_i32, %c0_i32_0 : i32, i32
  }
  func.func @transform_4(%arg0: i32) -> (i32, i32) {
    %c0_i32 = arith.constant 0 : i32
    %c0_i32_0 = arith.constant 0 : i32
    %c0_i32_1 = arith.constant 0 : i32
    return %c0_i32, %c0_i32_0 : i32, i32
  }
  func.func @transform_5(%arg0: i32) -> (i32, i32) {
    %c0_i32 = arith.constant 0 : i32
    %c0_i32_0 = arith.constant 0 : i32
    %c0_i32_1 = arith.constant 0 : i32
    return %c0_i32, %c0_i32_0 : i32, i32
  }
  func.func @transform_6(%arg0: i32) -> (i32, i32) {
    %c0_i32 = arith.constant 0 : i32
    %c0_i32_0 = arith.constant 0 : i32
    %c0_i32_1 = arith.constant 0 : i32
    return %c0_i32, %c0_i32_0 : i32, i32
  }
  func.func @transform_7(%arg0: i32) -> (i32, i32) {
    %c0_i32 = arith.constant 0 : i32
    %c0_i32_0 = arith.constant 0 : i32
    %c0_i32_1 = arith.constant 0 : i32
    return %c0_i32, %c0_i32_0 : i32, i32
  }
  func.func @transform_8(%arg0: i32) -> (i32, i32, i32) {
    %c0_i32 = arith.constant 0 : i32
    %c0_i32_0 = arith.constant 0 : i32
    %c0_i32_1 = arith.constant 0 : i32
    return %arg0, %c0_i32, %c0_i32_0 : i32, i32, i32
  }
}

</mosaic_0001>

<llo_original>
// kernel: tpu_custom_call.1
$region0: #{tpu_custom_call.1}
  #allocation0 [shape = 'u32[]', space=smem, size = 0x4, offset = 0x4, fixed_abs, tag = 'smem constant byte address 0x4 - core index']
  #allocation1 [shape = 'u32[144,128]{1,0:T(1,128)}', space=vmem, size = 0x12000, scoped, tag = 'internal scratch']
  %s0 = inlined_call_operand.hbm [shape: f32[2,8,128], index: 0, kind: input, shape index: {}]
  %s1 = inlined_call_operand.hbm [shape: f32[2,1,8], index: 1, kind: input, shape index: {}]
  %s2 = inlined_call_operand.vmem [shape: f32[1,128], index: 2, kind: input, shape index: {}]
  %s3 = inlined_call_operand.vmem [shape: f32[1,128], index: 3, kind: input, shape index: {}]
  %s4 = inlined_call_operand.hbm [shape: bf16[128,384], index: 4, kind: input, shape index: {}]
  %s5 = inlined_call_operand.vmem [shape: f32[1,384], index: 5, kind: input, shape index: {}]
  %s6 = inlined_call_operand.hbm [shape: bf16[128,128], index: 6, kind: input, shape index: {}]
  %s7 = inlined_call_operand.vmem [shape: f32[1,128], index: 7, kind: input, shape index: {}]
  %s8 = inlined_call_operand.hbm [shape: f32[2,8,128], index: 8, kind: output, shape index: {}]
  %s9 = sld [smem:[#allocation0]]
  $region81: #{tpu_custom_call.1} parent=0
    _
  %s11 = ssub.s32 1, %s9
  %s12 = scalar_select 0, %s11, %s9
  $region1: #{tpu_custom_call.1} parent=0
    #allocation2 [shape = 'u8[8192]{0}', space=vmem, size = 0x2000, scoped, tag = 'input window, operand 0']
    #allocation3 [shape = 's32[2]{0}', space=sflag, size = 0x8, scoped, tag = 'scoped memory for tpu_custom_call.1']
    #allocation4 [shape = 's32[2]{0}', space=sflag, size = 0x8, scoped, tag = 'scoped memory for tpu_custom_call.1']
    #allocation5 [shape = 'u8[1024]{0}', space=vmem, size = 0x400, scoped, tag = 'input window, operand 1']
    #allocation6 [shape = 's32[2]{0}', space=sflag, size = 0x8, scoped, tag = 'scoped memory for tpu_custom_call.1']
    #allocation7 [shape = 'u8[98304]{0}', space=vmem, size = 0x18000, scoped, tag = 'input window, operand 4, single buffered']
    #allocation8 [shape = 'u8[32768]{0}', space=vmem, size = 0x8000, scoped, tag = 'input window, operand 6, single buffered']
    #allocation9 [shape = 's32[1]{0}', space=sflag, size = 0x4, scoped, tag = 'scoped memory for tpu_custom_call.1']
    #allocation10 [shape = 'u8[8192]{0}', space=vmem, size = 0x2000, scoped, tag = 'output window, operand 0']
    %13 = vsyncpa [#allocation3], 0
    %s14 = scalar_lea.sflag [#allocation3], 1
    %15 = vsyncpa %s14, 0
    %16 = vsyncpa [#allocation6], 0
    %s17 = scalar_lea.sflag [#allocation6], 1
    %18 = vsyncpa %s17, 0
    %19 = vsyncpa [#allocation9], 0
    %20 = vsyncpa [#allocation4], 0
    %s21 = scalar_lea.sflag [#allocation4], 1
    %22 = vsyncpa %s21, 0
    loop: start=0, step=1, limit=4
    $region2: #{tpu_custom_call.1} parent=1 // loop_pre_header
      _
    $region3: #{tpu_custom_call.1} parent=1 // loop_header
      %s24 = sphi 0, %s28
      %p25 = scmp.ge.s32.totalorder %s24, 4
      %s34 = sphi 0, %s36
      %s37 = sphi 0, %s34
      %s38 = sphi 0, %s37
      %s54 = sphi 0, %s38
      %s60 = sphi 0, %s62
      %s63 = sphi 0, %s60
      %s64 = sphi 0, %s63
      %s80 = sphi 0, %s64
      %s84 = sphi 0, %s84
      %s86 = sphi 0, %s84
      %s87 = sphi 0, %s86
      %s101 = sphi 0, %s87
      %s105 = sphi 0, %s105
      %s107 = sphi 0, %s105
      %s108 = sphi 0, %s107
      %s122 = sphi 0, %s108
      %s126 = sphi 0, %s126
      %s128 = sphi 0, %s126
      %s129 = sphi 0, %s128
      %s143 = sphi 0, %s129
      %s147 = sphi 0, %s147
      %s149 = sphi 0, %s147
      %s150 = sphi 0, %s149
      %s164 = sphi 0, %s150
      %s168 = sphi 0, %s168
      %s170 = sphi 0, %s168
      %s171 = sphi 0, %s170
      %s185 = sphi 0, %s171
      %s189 = sphi 0, %s189
      %s191 = sphi 0, %s189
      %s192 = sphi 0, %s191
      %s206 = sphi 0, %s192
      %s212 = sphi 0, %s214
      %s215 = sphi 0, %s212
      %s216 = sphi 0, %s215
      %s232 = sphi 0, %s216
    $region4: #{tpu_custom_call.1} parent=1 // loop_header_branch
      %27 = sbr.rel (%p25) target = $region8
    $region5: #{tpu_custom_call.1} parent=1 // loop_body
      %s29 = ssub.s32 %s24, 1
      %s30 = ssub.s32 %s24, 2
      %s31 = sadd.s32 %s24, 1
      %s32 = ssub.s32 %s24, %s31
      %p33 = scmp.eq.s32.totalorder %s32, 0
      %s35 = sadd.s32 %s34, 1
      %s36 = scalar_select %p33, %s34, %s35
      %p39 = pneg %p33
      %p40 = scmp.eq.s32.totalorder %s24, 1
      %p41 = por %p39, %p40
      %p42 = scmp.ne.s32.totalorder %s34, %s37
      %p43 = scmp.eq.s32.totalorder %s24, 0
      %p44 = por %p42, %p43
      %p45 = scmp.ne.s32.totalorder %s34, %s37
      %p46 = scmp.eq.s32.totalorder %s29, 1
      %p47 = por %p45, %p46
      %p48 = scmp.ne.s32.totalorder %s37, %s38
      %p49 = scmp.eq.s32.totalorder %s29, 0
      %p50 = por %p48, %p49
      %p51 = scmp.ne.s32.totalorder %s37, %s38
      %p52 = scmp.eq.s32.totalorder %s30, 1
      %p53 = por %p51, %p52
      %p55 = scmp.ne.s32.totalorder %s38, %s54
      %p56 = scmp.eq.s32.totalorder %s30, 0
      %p57 = por %p55, %p56
      %s58 = ssub.s32 %s24, %s31
      %p59 = scmp.eq.s32.totalorder %s58, 0
      %s61 = sadd.s32 %s60, 1
      %s62 = scalar_select %p59, %s60, %s61
      %p65 = pneg %p59
      %p66 = scmp.eq.s32.totalorder %s24, 1
      %p67 = por %p65, %p66
      %p68 = scmp.ne.s32.totalorder %s60, %s63
      %p69 = scmp.eq.s32.totalorder %s24, 0
      %p70 = por %p68, %p69
      %p71 = scmp.ne.s32.totalorder %s60, %s63
      %p72 = scmp.eq.s32.totalorder %s29, 1
      %p73 = por %p71, %p72
      %p74 = scmp.ne.s32.totalorder %s63, %s64
      %p75 = scmp.eq.s32.totalorder %s29, 0
      %p76 = por %p74, %p75
      %p77 = scmp.ne.s32.totalorder %s63, %s64
      %p78 = scmp.eq.s32.totalorder %s30, 1
      %p79 = por %p77, %p78
      %p81 = scmp.ne.s32.totalorder %s64, %s80
      %p82 = scmp.eq.s32.totalorder %s30, 0
      %p83 = por %p81, %p82
      %s85 = sadd.s32 %s84, 1
      %p88 = scmp.eq.s32.totalorder %s24, 1
      %p89 = scmp.ne.s32.totalorder %s84, %s86
      %p90 = scmp.eq.s32.totalorder %s24, 0
      %p91 = por %p89, %p90
      %p92 = scmp.ne.s32.totalorder %s84, %s86
      %p93 = scmp.eq.s32.totalorder %s29, 1
      %p94 = por %p92, %p93
      %p95 = scmp.ne.s32.totalorder %s86, %s87
      %p96 = scmp.eq.s32.totalorder %s29, 0
      %p97 = por %p95, %p96
      %p98 = scmp.ne.s32.totalorder %s86, %s87
      %p99 = scmp.eq.s32.totalorder %s30, 1
      %p100 = por %p98, %p99
      %p102 = scmp.ne.s32.totalorder %s87, %s101
      %p103 = scmp.eq.s32.totalorder %s30, 0
      %p104 = por %p102, %p103
      %s106 = sadd.s32 %s105, 1
      %p109 = scmp.eq.s32.totalorder %s24, 1
      %p110 = scmp.ne.s32.totalorder %s105, %s107
      %p111 = scmp.eq.s32.totalorder %s24, 0
      %p112 = por %p110, %p111
      %p113 = scmp.ne.s32.totalorder %s105, %s107
      %p114 = scmp.eq.s32.totalorder %s29, 1
      %p115 = por %p113, %p114
      %p116 = scmp.ne.s32.totalorder %s107, %s108
      %p117 = scmp.eq.s32.totalorder %s29, 0
      %p118 = por %p116, %p117
      %p119 = scmp.ne.s32.totalorder %s107, %s108
      %p120 = scmp.eq.s32.totalorder %s30, 1
      %p121 = por %p119, %p120
      %p123 = scmp.ne.s32.totalorder %s108, %s122
      %p124 = scmp.eq.s32.totalorder %s30, 0
      %p125 = por %p123, %p124
      %s127 = sadd.s32 %s126, 1
      %p130 = scmp.eq.s32.totalorder %s24, 1
      %p131 = scmp.ne.s32.totalorder %s126, %s128
      %p132 = scmp.eq.s32.totalorder %s24, 0
      %p133 = por %p131, %p132
      %p134 = scmp.ne.s32.totalorder %s126, %s128
      %p135 = scmp.eq.s32.totalorder %s29, 1
      %p136 = por %p134, %p135
      %p137 = scmp.ne.s32.totalorder %s128, %s129
      %p138 = scmp.eq.s32.totalorder %s29, 0
      %p139 = por %p137, %p138
      %p140 = scmp.ne.s32.totalorder %s128, %s129
      %p141 = scmp.eq.s32.totalorder %s30, 1
      %p142 = por %p140, %p141
      %p144 = scmp.ne.s32.totalorder %s129, %s143
      %p145 = scmp.eq.s32.totalorder %s30, 0
      %p146 = por %p144, %p145
      %s148 = sadd.s32 %s147, 1
      %p151 = scmp.eq.s32.totalorder %s24, 1
      %p152 = scmp.ne.s32.totalorder %s147, %s149
      %p153 = scmp.eq.s32.totalorder %s24, 0
      %p154 = por %p152, %p153
      %p155 = scmp.ne.s32.totalorder %s147, %s149
      %p156 = scmp.eq.s32.totalorder %s29, 1
      %p157 = por %p155, %p156
      %p158 = scmp.ne.s32.totalorder %s149, %s150
      %p159 = scmp.eq.s32.totalorder %s29, 0
      %p160 = por %p158, %p159
      %p161 = scmp.ne.s32.totalorder %s149, %s150
      %p162 = scmp.eq.s32.totalorder %s30, 1
      %p163 = por %p161, %p162
      %p165 = scmp.ne.s32.totalorder %s150, %s164
      %p166 = scmp.eq.s32.totalorder %s30, 0
      %p167 = por %p165, %p166
      %s169 = sadd.s32 %s168, 1
      %p172 = scmp.eq.s32.totalorder %s24, 1
      %p173 = scmp.ne.s32.totalorder %s168, %s170
      %p174 = scmp.eq.s32.totalorder %s24, 0
      %p175 = por %p173, %p174
      %p176 = scmp.ne.s32.totalorder %s168, %s170
      %p177 = scmp.eq.s32.totalorder %s29, 1
      %p178 = por %p176, %p177
      %p179 = scmp.ne.s32.totalorder %s170, %s171
      %p180 = scmp.eq.s32.totalorder %s29, 0
      %p181 = por %p179, %p180
      %p182 = scmp.ne.s32.totalorder %s170, %s171
      %p183 = scmp.eq.s32.totalorder %s30, 1
      %p184 = por %p182, %p183
      %p186 = scmp.ne.s32.totalorder %s171, %s185
      %p187 = scmp.eq.s32.totalorder %s30, 0
      %p188 = por %p186, %p187
      %s190 = sadd.s32 %s189, 1
      %p193 = scmp.eq.s32.totalorder %s24, 1
      %p194 = scmp.ne.s32.totalorder %s189, %s191
      %p195 = scmp.eq.s32.totalorder %s24, 0
      %p196 = por %p194, %p195
      %p197 = scmp.ne.s32.totalorder %s189, %s191
      %p198 = scmp.eq.s32.totalorder %s29, 1
      %p199 = por %p197, %p198
      %p200 = scmp.ne.s32.totalorder %s191, %s192
      %p201 = scmp.eq.s32.totalorder %s29, 0
      %p202 = por %p200, %p201
      %p203 = scmp.ne.s32.totalorder %s191, %s192
      %p204 = scmp.eq.s32.totalorder %s30, 1
      %p205 = por %p203, %p204
      %p207 = scmp.ne.s32.totalorder %s192, %s206
      %p208 = scmp.eq.s32.totalorder %s30, 0
      %p209 = por %p207, %p208
      %s210 = ssub.s32 %s24, %s31
      %p211 = scmp.eq.s32.totalorder %s210, 0
      %s213 = sadd.s32 %s212, 1
      %s214 = scalar_select %p211, %s212, %s213
      %p217 = pneg %p211
      %p218 = scmp.eq.s32.totalorder %s24, 1
      %p219 = por %p217, %p218
      %p220 = scmp.ne.s32.totalorder %s212, %s215
      %p221 = scmp.eq.s32.totalorder %s24, 0
      %p222 = por %p220, %p221
      %p223 = scmp.ne.s32.totalorder %s212, %s215
      %p224 = scmp.eq.s32.totalorder %s29, 1
      %p225 = por %p223, %p224
      %p226 = scmp.ne.s32.totalorder %s215, %s216
      %p227 = scmp.eq.s32.totalorder %s29, 0
      %p228 = por %p226, %p227
      %p229 = scmp.ne.s32.totalorder %s215, %s216
      %p230 = scmp.eq.s32.totalorder %s30, 1
      %p231 = por %p229, %p230
      %p233 = scmp.ne.s32.totalorder %s216, %s232
      %p234 = scmp.eq.s32.totalorder %s30, 0
      %p235 = por %p233, %p234
      %p236 = scmp.le.s32.totalorder 1, %s24
      %p237 = scmp.lt.s32.totalorder %s24, 3
      %p238 = pnand %p236, %p237
      %p239 = pneg %p238
      // Predicated region
      $region9: #{tpu_custom_call.1} parent=5 // pred_check
        _
      $region10: #{tpu_custom_call.1} parent=5 // pred_check_branch
        %241 = sbr.rel (%p238) target = $region12
      $region11: #{tpu_custom_call.1} parent=5 // pred_region
        %s242 = ssub.s32 %s24, 1
        // Predicated region
        $region13: #{tpu_custom_call.1} parent=11 // pred_check
          %p243 = pneg %p97
        $region14: #{tpu_custom_call.1} parent=11 // pred_check_branch
          %245 = sbr.rel (%p243) target = $region16
        $region15: #{tpu_custom_call.1} parent=11 // pred_region
          _
        $region16: #{tpu_custom_call.1} parent=11 // pred_fallthru
          _
        // Predicated region
        $region17: #{tpu_custom_call.1} parent=11 // pred_check
          %p246 = pneg %p118
        $region18: #{tpu_custom_call.1} parent=11 // pred_check_branch
          %248 = sbr.rel (%p246) target = $region20
        $region19: #{tpu_custom_call.1} parent=11 // pred_region
          _
        $region20: #{tpu_custom_call.1} parent=11 // pred_fallthru
          _
        // Predicated region
        $region21: #{tpu_custom_call.1} parent=11 // pred_check
          %p249 = pneg %p139
        $region22: #{tpu_custom_call.1} parent=11 // pred_check_branch
          %251 = sbr.rel (%p249) target = $region24
        $region23: #{tpu_custom_call.1} parent=11 // pred_region
          %s253 = ssub.s32 3072, 3072
          %254 = vsyncadd [#allocation6], %s253
          %s255 = sshll.u32 [#allocation7], 4
          %s256 = int_to_ptr.vmem [resolvable:$true] %s255
          %261 = dma.hbm_to_vmem [thread:$0]  %s4, 3072, %s256, [#allocation6], 192, 192, 12
        $region24: #{tpu_custom_call.1} parent=11 // pred_fallthru
          _
        // Predicated region
        $region25: #{tpu_custom_call.1} parent=11 // pred_check
          %p262 = pneg %p160
        $region26: #{tpu_custom_call.1} parent=11 // pred_check_branch
          %264 = sbr.rel (%p262) target = $region28
        $region27: #{tpu_custom_call.1} parent=11 // pred_region
          _
        $region28: #{tpu_custom_call.1} parent=11 // pred_fallthru
          _
        // Predicated region
        $region29: #{tpu_custom_call.1} parent=11 // pred_check
          %p265 = pneg %p181
        $region30: #{tpu_custom_call.1} parent=11 // pred_check_branch
          %267 = sbr.rel (%p265) target = $region32
        $region31: #{tpu_custom_call.1} parent=11 // pred_region
          %s269 = ssub.s32 1024, 1024
          %270 = vsyncadd [#allocation9], %s269
          %s271 = sshll.u32 [#allocation8], 4
          %s272 = int_to_ptr.vmem [resolvable:$true] %s271
          %277 = dma.hbm_to_vmem [thread:$0]  %s6, 1024, %s272, [#allocation9], 64, 64, 4
        $region32: #{tpu_custom_call.1} parent=11 // pred_fallthru
          _
        // Predicated region
        $region33: #{tpu_custom_call.1} parent=11 // pred_check
          %p278 = pneg %p202
        $region34: #{tpu_custom_call.1} parent=11 // pred_check_branch
          %280 = sbr.rel (%p278) target = $region36
        $region35: #{tpu_custom_call.1} parent=11 // pred_region
          _
        $region36: #{tpu_custom_call.1} parent=11 // pred_fallthru
          _
      $region12: #{tpu_custom_call.1} parent=5 // pred_fallthru
        _
      %p281 = scmp.lt.s32.totalorder %s24, 2
      // Predicated region
      $region37: #{tpu_custom_call.1} parent=5 // pred_check
        %p282 = pneg %p281
      $region38: #{tpu_custom_call.1} parent=5 // pred_check_branch
        %284 = sbr.rel (%p282) target = $region40
      $region39: #{tpu_custom_call.1} parent=5 // pred_region
        // Predicated region
        $region41: #{tpu_custom_call.1} parent=39 // pred_check
          %p285 = pneg %p44
        $region42: #{tpu_custom_call.1} parent=39 // pred_check_branch
          %287 = sbr.rel (%p285) target = $region44
        $region43: #{tpu_custom_call.1} parent=39 // pred_region
          %s288 = sand.u32 %s34, 1
          %s289 = scalar_lea.sflag [#allocation3], %s288
          %s290 = sand.u32 %s34, 1
          %s291 = smul.addr %s290, 8
          %s292 = scalar_lea.vmem [#allocation2], %s291
          %s294 = ssub.s32 128, 128
          %295 = vsyncadd %s289, %s294
          %s296 = smul.addr %s24, 128
          %s297 = scalar_lea.hbm %s0, %s296
          %s299 = sshll.u32 %s292, 4
          %s300 = int_to_ptr.vmem [resolvable:$true] %s299
          %302 = dma.hbm_to_vmem [thread:$0]  %s297, 128, %s300, %s289
        $region44: #{tpu_custom_call.1} parent=39 // pred_fallthru
          _
        // Predicated region
        $region45: #{tpu_custom_call.1} parent=39 // pred_check
          %p303 = pneg %p70
        $region46: #{tpu_custom_call.1} parent=39 // pred_check_branch
          %305 = sbr.rel (%p303) target = $region48
        $region47: #{tpu_custom_call.1} parent=39 // pred_region
          %s306 = sand.u32 %s24, 1
          %s307 = scalar_lea.sflag [#allocation6], %s306
          %s308 = sand.u32 %s60, 1
          %s309 = scalar_lea.vmem [#allocation5], %s308
          %s311 = ssub.s32 16, 16
          %312 = vsyncadd %s307, %s311
          %s313 = smul.addr %s24, 16
          %s314 = scalar_lea.hbm %s1, %s313
          %s316 = sshll.u32 %s309, 4
          %s317 = int_to_ptr.vmem [resolvable:$true] %s316
          %319 = dma.hbm_to_vmem [thread:$0]  %s314, 16, %s317, %s307
        $region48: #{tpu_custom_call.1} parent=39 // pred_fallthru
          _
      $region40: #{tpu_custom_call.1} parent=5 // pred_fallthru
        _
      %p320 = scmp.le.s32.totalorder 1, %s24
      %p321 = scmp.lt.s32.totalorder %s24, 3
      %p322 = pnand %p320, %p321
      %p323 = pneg %p322
      // Predicated region
      $region49: #{tpu_custom_call.1} parent=5 // pred_check
        _
      $region50: #{tpu_custom_call.1} parent=5 // pred_check_branch
        %325 = sbr.rel (%p322) target = $region52
      $region51: #{tpu_custom_call.1} parent=5 // pred_region
        %s326 = ssub.s32 %s24, 1
        %s327 = sand.u32 %s37, 1
        %s328 = scalar_lea.sflag [#allocation3], %s327
        %s329 = sand.u32 %s37, 1
        %s330 = smul.addr %s329, 8
        %s331 = scalar_lea.vmem [#allocation2], %s330
        // Predicated region
        $region53: #{tpu_custom_call.1} parent=51 // pred_check
          %p332 = pneg %p50
        $region54: #{tpu_custom_call.1} parent=51 // pred_check_branch
          %334 = sbr.rel (%p332) target = $region56
        $region55: #{tpu_custom_call.1} parent=51 // pred_region
          %335 = dma.done %s328, 128
        $region56: #{tpu_custom_call.1} parent=51 // pred_fallthru
          _
        %s336 = sand.u32 %s29, 1
        %s337 = scalar_lea.sflag [#allocation6], %s336
        %s338 = sand.u32 %s63, 1
        %s339 = scalar_lea.vmem [#allocation5], %s338
        // Predicated region
        $region57: #{tpu_custom_call.1} parent=51 // pred_check
          %p340 = pneg %p76
        $region58: #{tpu_custom_call.1} parent=51 // pred_check_branch
          %342 = sbr.rel (%p340) target = $region60
        $region59: #{tpu_custom_call.1} parent=51 // pred_region
          %343 = dma.done %s337, 16
        $region60: #{tpu_custom_call.1} parent=51 // pred_fallthru
          _
        // Predicated region
        $region61: #{tpu_custom_call.1} parent=51 // pred_check
          %p344 = pneg %p139
        $region62: #{tpu_custom_call.1} parent=51 // pred_check_branch
          %346 = sbr.rel (%p344) target = $region64
        $region63: #{tpu_custom_call.1} parent=51 // pred_region
          %347 = dma.done [#allocation6], 3072
        $region64: #{tpu_custom_call.1} parent=51 // pred_fallthru
          _
        // Predicated region
        $region65: #{tpu_custom_call.1} parent=51 // pred_check
          %p348 = pneg %p181
        $region66: #{tpu_custom_call.1} parent=51 // pred_check_branch
          %350 = sbr.rel (%p348) target = $region68
        $region67: #{tpu_custom_call.1} parent=51 // pred_region
          %351 = dma.done [#allocation9], 1024
        $region68: #{tpu_custom_call.1} parent=51 // pred_fallthru
          _
        %s352 = sand.u32 %s37, 1
        %s353 = scalar_lea.sflag [#allocation3], %s352
        %s354 = sand.u32 %s37, 1
        %s355 = smul.addr %s354, 8
        %s356 = scalar_lea.vmem [#allocation2], %s355
        %p357 = pneg %p50
        %p358 = pneg %p47
        %s359 = sand.u32 %s29, 1
        %s360 = scalar_lea.sflag [#allocation6], %s359
        %s361 = sand.u32 %s63, 1
        %s362 = scalar_lea.vmem [#allocation5], %s361
        %p363 = pneg %p76
        %p364 = pneg %p73
        %p365 = pneg %p97
        %p366 = pneg %p94
        %p367 = pneg %p118
        %p368 = pneg %p115
        %p369 = pneg %p139
        %p370 = pneg %p136
        %p371 = pneg %p160
        %p372 = pneg %p157
        %p373 = pneg %p181
        %p374 = pneg %p178
        %p375 = pneg %p202
        %p376 = pneg %p199
        %p377 = pneg %p228
        %p378 = pneg %p225
        %s379 = sand.u32 %s215, 1
        %s380 = scalar_lea.sflag [#allocation4], %s379
        %s381 = sand.u32 %s215, 1
        %s382 = smul.addr %s381, 8
        %s383 = scalar_lea.vmem [#allocation10], %s382
        %v385 = vld [vmem:[%s331] sm:$0xff]
        %386 = vadd.xlane.f32.xlu0 %v385
        %v387 = vpop.xlane.xlu0 %386
        %v388 = vrcp.pop 128.0
        %v389 = vmul.f32 %v387, %v388
        %v390 = vsub.f32 %v385, %v389
        %v391 = vmul.f32 %v390, %v390
        %392 = vadd.xlane.f32.xlu0 %v391
        %v393 = vpop.xlane.xlu0 %392
        %v394 = vmul.f32 %v393, %v388
        %v395 = vadd.f32 %v394, 1e-05
        %v396 = vrsqrt.pop %v395
        %v397 = vmul.f32 %v390, %v396
        %v398 = vld [vmem:[%s2] sm:$0x1]
        %v400 = vlaneseq
        %v401 = vshrl.u32 %v400, 7
        %v402 = vsub.s32 0, %v401
        %v403 = vrot.slane %v398, %v402
        %v405 = vmul.f32 %v397, %v403
        %v406 = vld [vmem:[%s3] sm:$0x1]
        %v408 = vlaneseq
        %v409 = vshrl.u32 %v408, 7
        %v410 = vsub.s32 0, %v409
        %v411 = vrot.slane %v406, %v410
        %v413 = vadd.f32 %v405, %v411
        %v414 = vpack.c.bf16 %v413, %v413
        %v415 = vld [vmem:[#allocation7] sm:$0xff]
        %v416 = vld [vmem:[#allocation7 + $0x8] sm:$0xf]
        %v417 = vld [vmem:[#allocation7 + $0xc] sm:$0xff]
        %v418 = vld [vmem:[#allocation7 + $0x14] sm:$0xf]
        %v419 = vld [vmem:[#allocation7 + $0x18] sm:$0xff]
        %v420 = vld [vmem:[#allocation7 + $0x20] sm:$0xf]
        %v421 = vld [vmem:[#allocation7 + $0x24] sm:$0xff]
        %v422 = vld [vmem:[#allocation7 + $0x2c] sm:$0xf]
        %v423 = vld [vmem:[#allocation7 + $0x30] sm:$0xff]
        %v424 = vld [vmem:[#allocation7 + $0x38] sm:$0xf]
        %v425 = vld [vmem:[#allocation7 + $0x3c] sm:$0xff]
        %v426 = vld [vmem:[#allocation7 + $0x44] sm:$0xf]
        %v427 = vld [vmem:[#allocation7 + $0x48] sm:$0xff]
        %v428 = vld [vmem:[#allocation7 + $0x50] sm:$0xf]
        %v429 = vld [vmem:[#allocation7 + $0x54] sm:$0xff]
        %v430 = vld [vmem:[#allocation7 + $0x5c] sm:$0xf]
        %v431 = vld [vmem:[#allocation7 + $0x60] sm:$0xff]
        %v432 = vld [vmem:[#allocation7 + $0x68] sm:$0xf]
        %v433 = vld [vmem:[#allocation7 + $0x6c] sm:$0xff]
        %v434 = vld [vmem:[#allocation7 + $0x74] sm:$0xf]
        %v435 = vld [vmem:[#allocation7 + $0x78] sm:$0xff]
        %v436 = vld [vmem:[#allocation7 + $0x80] sm:$0xf]
        %v437 = vld [vmem:[#allocation7 + $0x84] sm:$0xff]
        %v438 = vld [vmem:[#allocation7 + $0x8c] sm:$0xf]
        %v439 = vld [vmem:[#allocation7 + $0x90] sm:$0xff]
        %v440 = vld [vmem:[#allocation7 + $0x98] sm:$0xf]
        %v441 = vld [vmem:[#allocation7 + $0x9c] sm:$0xff]
        %v442 = vld [vmem:[#allocation7 + $0xa4] sm:$0xf]
        %v443 = vld [vmem:[#allocation7 + $0xa8] sm:$0xff]
        %v444 = vld [vmem:[#allocation7 + $0xb0] sm:$0xf]
        %v445 = vld [vmem:[#allocation7 + $0xb4] sm:$0xff]
        %v446 = vld [vmem:[#allocation7 + $0xbc] sm:$0xf]
        %v447 = vld [vmem:[%s5] sm:$0x7]
        %v449 = vlaneseq
        %v450 = vshrl.u32 %v449, 7
        %v451 = vsub.s32 0, %v450
        %v452 = vrot.slane %v447, %v451
        %v453 = vlaneseq
        %v454 = vshrl.u32 %v453, 7
        %v455 = vsub.s32 1, %v454
        %v456 = vrot.slane %v447, %v455
        %v457 = vlaneseq
        %v458 = vshrl.u32 %v457, 7
        %v459 = vsub.s32 2, %v458
        %v460 = vrot.slane %v447, %v459
        %v496 = vunpack.c.l.b16 %v415
        %v497 = vunpack.c.h.b16 %v415
        %v498 = vunpack.c.l.b16 %v416
        %v499 = vunpack.c.l.b16 %v417
        %v500 = vunpack.c.h.b16 %v417
        %v501 = vunpack.c.l.b16 %v418
        %v502 = vunpack.c.l.b16 %v419
        %v503 = vunpack.c.h.b16 %v419
        %v504 = vunpack.c.l.b16 %v420
        %v505 = vunpack.c.l.b16 %v421
        %v506 = vunpack.c.h.b16 %v421
        %v507 = vunpack.c.l.b16 %v422
        %v508 = vunpack.c.l.b16 %v423
        %v509 = vunpack.c.h.b16 %v423
        %v510 = vunpack.c.l.b16 %v424
        %v511 = vunpack.c.l.b16 %v425
        %v512 = vunpack.c.h.b16 %v425
        %v513 = vunpack.c.l.b16 %v426
        %v514 = vunpack.c.l.b16 %v427
        %v515 = vunpack.c.h.b16 %v427
        %v516 = vunpack.c.l.b16 %v428
        %v517 = vunpack.c.l.b16 %v429
        %v518 = vunpack.c.h.b16 %v429
        %v519 = vunpack.c.l.b16 %v430
        %v520 = vunpack.c.l.b16 %v431
        %v521 = vunpack.c.h.b16 %v431
        %v522 = vunpack.c.l.b16 %v432
        %v523 = vunpack.c.l.b16 %v433
        %v524 = vunpack.c.h.b16 %v433
        %v525 = vunpack.c.l.b16 %v434
        %v526 = vunpack.c.l.b16 %v435
        %v527 = vunpack.c.h.b16 %v435
        %v528 = vunpack.c.l.b16 %v436
        %v529 = vunpack.c.l.b16 %v437
        %v530 = vunpack.c.h.b16 %v437
        %v531 = vunpack.c.l.b16 %v438
        %v532 = vunpack.c.l.b16 %v439
        %v533 = vunpack.c.h.b16 %v439
        %v534 = vunpack.c.l.b16 %v440
        %v535 = vunpack.c.l.b16 %v441
        %v536 = vunpack.c.h.b16 %v441
        %v537 = vunpack.c.l.b16 %v442
        %v538 = vunpack.c.l.b16 %v443
        %v539 = vunpack.c.h.b16 %v443
        %v540 = vunpack.c.l.b16 %v444
        %v541 = vunpack.c.l.b16 %v445
        %v542 = vunpack.c.h.b16 %v445
        %v543 = vunpack.c.l.b16 %v446
        %v544 = vpack.c.b16 %v499, %v496
        %v545 = vpack.c.b16 %v500, %v497
        %v546 = vpack.c.b16 %v501, %v498
        %v547 = vpack.c.b16 %v505, %v502
        %v548 = vpack.c.b16 %v506, %v503
        %v549 = vpack.c.b16 %v507, %v504
        %v550 = vpack.c.b16 %v511, %v508
        %v551 = vpack.c.b16 %v512, %v509
        %v552 = vpack.c.b16 %v513, %v510
        %v553 = vpack.c.b16 %v517, %v514
        %v554 = vpack.c.b16 %v518, %v515
        %v555 = vpack.c.b16 %v519, %v516
        %v556 = vpack.c.b16 %v523, %v520
        %v557 = vpack.c.b16 %v524, %v521
        %v558 = vpack.c.b16 %v525, %v522
        %v559 = vpack.c.b16 %v529, %v526
        %v560 = vpack.c.b16 %v530, %v527
        %v561 = vpack.c.b16 %v531, %v528
        %v562 = vpack.c.b16 %v535, %v532
        %v563 = vpack.c.b16 %v536, %v533
        %v564 = vpack.c.b16 %v537, %v534
        %v565 = vpack.c.b16 %v541, %v538
        %v566 = vpack.c.b16 %v542, %v539
        %v567 = vpack.c.b16 %v543, %v540
        %592 = vmatprep.subr.bf16.mxu0 %v566
        %593 = vmatpush1.bf16.msra.mxu0 %v565
        %594 = vmatprep.subr.bf16.mxu0 %v563
        %595 = vmatpush1.bf16.msra.mxu0 %v562
        %596 = vmatprep.subr.bf16.mxu0 %v560
        %597 = vmatpush1.bf16.msra.mxu0 %v559
        %598 = vmatprep.subr.bf16.mxu0 %v557
        %599 = vmatpush1.bf16.msra.mxu0 %v556
        %600 = vmatprep.subr.bf16.mxu0 %v554
        %601 = vmatpush1.bf16.msra.mxu0 %v553
        %602 = vmatprep.subr.bf16.mxu0 %v551
        %603 = vmatpush1.bf16.msra.mxu0 %v550
        %604 = vmatprep.subr.bf16.mxu0 %v548
        %605 = vmatpush1.bf16.msra.mxu0 %v547
        %606 = vmatprep.subr.bf16.mxu0 %v545
        %607 = vmatpush1.bf16.msra.mxu0 %v544
        %608 = vmatprep.subr.bf16.mxu0 0
        %609 = vmatpush2.bf16.msra.mxu0 0
        %610 = vmatprep.subr.bf16.mxu0 0
        %611 = vmatpush2.bf16.msra.mxu0 0
        %612 = vmatprep.subr.bf16.mxu0 0
        %613 = vmatpush2.bf16.msra.mxu0 0
        %614 = vmatprep.subr.bf16.mxu0 0
        %615 = vmatpush2.bf16.msra.mxu0 0
        %616 = vmatprep.subr.bf16.mxu0 0
        %617 = vmatpush2.bf16.msra.mxu0 0
        %618 = vmatprep.subr.bf16.mxu0 0
        %619 = vmatpush2.bf16.msra.mxu0 0
        %620 = vmatprep.subr.bf16.mxu0 0
        %621 = vmatpush2.bf16.msra.mxu0 0
        %622 = vmatprep.subr.bf16.mxu0 0
        %623 = vmatpush2.bf16.msra.mxu0 0
        %624 = vmatprep.mubr.bf16.mxu0 0
        %625 = vmatmul.mubr.bf16.gmra.mxu0 %v414
        %v626 = vpop.f32.mrf.mxu0
        %v627 = vadd.f32 %v452, %v626
        %v628 = vpop.f32.mrf.mxu0
        %v629 = vadd.f32 %v456, %v628
        %v630 = vpop.f32.mrf.mxu0
        %v631 = vpop.f32.mrf.mxu0
        %632 = vdwg.mxu0
        %633 = vmatprep.subr.bf16.mxu0 0
        %634 = vmatpush1.bf16.msra.mxu0 %v567
        %635 = vmatprep.subr.bf16.mxu0 0
        %636 = vmatpush1.bf16.msra.mxu0 %v564
        %637 = vmatprep.subr.bf16.mxu0 0
        %638 = vmatpush1.bf16.msra.mxu0 %v561
        %639 = vmatprep.subr.bf16.mxu0 0
        %640 = vmatpush1.bf16.msra.mxu0 %v558
        %641 = vmatprep.subr.bf16.mxu0 0
        %642 = vmatpush1.bf16.msra.mxu0 %v555
        %643 = vmatprep.subr.bf16.mxu0 0
        %644 = vmatpush1.bf16.msra.mxu0 %v552
        %645 = vmatprep.subr.bf16.mxu0 0
        %646 = vmatpush1.bf16.msra.mxu0 %v549
        %647 = vmatprep.subr.bf16.mxu0 0
        %648 = vmatpush1.bf16.msra.mxu0 %v546
        %649 = vmatprep.subr.bf16.mxu0 0
        %650 = vmatpush2.bf16.msra.mxu0 0
        %651 = vmatprep.subr.bf16.mxu0 0
        %652 = vmatpush2.bf16.msra.mxu0 0
        %653 = vmatprep.subr.bf16.mxu0 0
        %654 = vmatpush2.bf16.msra.mxu0 0
        %655 = vmatprep.subr.bf16.mxu0 0
        %656 = vmatpush2.bf16.msra.mxu0 0
        %657 = vmatprep.subr.bf16.mxu0 0
        %658 = vmatpush2.bf16.msra.mxu0 0
        %659 = vmatprep.subr.bf16.mxu0 0
        %660 = vmatpush2.bf16.msra.mxu0 0
        %661 = vmatprep.subr.bf16.mxu0 0
        %662 = vmatpush2.bf16.msra.mxu0 0
        %663 = vmatprep.subr.bf16.mxu0 0
        %664 = vmatpush2.bf16.msra.mxu0 0
        %665 = vmatprep.mubr.bf16.mxu0 0
        %666 = vmatmul.mubr.bf16.gmra.mxu0 %v414
        %v667 = vpop.f32.mrf.mxu0
        %v668 = vadd.f32 %v460, %v667
        %v669 = vpop.f32.mrf.mxu0
        %v670 = vpop.f32.mrf.mxu0
        %v671 = vpop.f32.mrf.mxu0
        %672 = vdwg.mxu0
        %v673 = vpack.c.bf16 %v627, %v627
        %v674 = vpack.c.bf16 %v629, %v629
        %v675 = vpack.c.bf16 %v668, %v668
        %v676 = vld [vmem:[%s339] sm:$0x1]
        %vm677 = vcmp.gt.f32.partialorder %v676, 0.0
        %v678 = vsel %vm677, -10000000.0, 0.0
        %vm679 = vcmask 130048
        %v681 = vsel %vm679, %v673, 0
        %v684 = vsel %vm679, %v674, 0
        %686 = vmatprep.subr.bf16.mxu0 0
        %687 = vmatpush1.bf16.xpose.msra.mxu0 0
        %688 = vmatprep.subr.bf16.mxu0 0
        %689 = vmatpush1.bf16.xpose.msra.mxu0 0
        %690 = vmatprep.subr.bf16.mxu0 0
        %691 = vmatpush1.bf16.xpose.msra.mxu0 0
        %692 = vmatprep.subr.bf16.mxu0 0
        %693 = vmatpush1.bf16.xpose.msra.mxu0 0
        %694 = vmatprep.subr.bf16.mxu0 0
        %695 = vmatpush1.bf16.xpose.msra.mxu0 0
        %696 = vmatprep.subr.bf16.mxu0 0
        %697 = vmatpush1.bf16.xpose.msra.mxu0 0
        %698 = vmatprep.subr.bf16.mxu0 0
        %699 = vmatpush1.bf16.xpose.msra.mxu0 0
        %700 = vmatprep.subr.bf16.mxu0 0
        %701 = vmatpush1.bf16.xpose.msra.mxu0 %v684
        %702 = vmatprep.subr.bf16.mxu0 0
        %703 = vmatpush2.bf16.xpose.msra.mxu0 0
        %704 = vmatprep.subr.bf16.mxu0 0
        %705 = vmatpush2.bf16.xpose.msra.mxu0 0
        %706 = vmatprep.subr.bf16.mxu0 0
        %707 = vmatpush2.bf16.xpose.msra.mxu0 0
        %708 = vmatprep.subr.bf16.mxu0 0
        %709 = vmatpush2.bf16.xpose.msra.mxu0 0
        %710 = vmatprep.subr.bf16.mxu0 0
        %711 = vmatpush2.bf16.xpose.msra.mxu0 0
        %712 = vmatprep.subr.bf16.mxu0 0
        %713 = vmatpush2.bf16.xpose.msra.mxu0 0
        %714 = vmatprep.subr.bf16.mxu0 0
        %715 = vmatpush2.bf16.xpose.msra.mxu0 0
        %716 = vmatprep.subr.bf16.mxu0 0
        %717 = vmatpush2.bf16.xpose.msra.mxu0 0
        %718 = vmatprep.mubr.bf16.mxu0 0
        %719 = vmatmul.mubr.bf16.gmra.mxu0 %v681
        %v720 = vpop.f32.mrf.mxu0
        %v721 = vadd.f32 0.0, %v720
        %v722 = vpop.f32.mrf.mxu0
        %v723 = vpop.f32.mrf.mxu0
        %v724 = vpop.f32.mrf.mxu0
        %725 = vdwg.mxu0
        %v726 = vmul.f32 %v721, 0.25
        %v728 = vlaneseq
        %v729 = vshrl.u32 %v728, 7
        %v730 = vsub.s32 0, %v729
        %v731 = vrot.slane %v678, %v730
        %v733 = vadd.f32 %v726, %v731
        %vm734 = vcmask 64512
        %v735 = vsel %vm734, %v733, -inf
        %736 = vmax.xlane.f32.xlu0 %v735
        %v737 = vpop.xlane.xlu0 %736
        %v738 = vsub.f32 %v733, %v737
        %v739 = vmul.f32 %v738, 1.442695
        %v740 = vpow.pop %v739
        %v741 = vsel %vm734, %v740, 0.0
        %742 = vadd.xlane.f32.xlu0 %v741
        %v743 = vpop.xlane.xlu0 %742
        %v744 = vrcp.pop %v743
        %v745 = vmul.f32 %v740, %v744
        %v746 = vpack.c.bf16 %v745, %v745
        %v748 = vsel %vm734, %v746, 0
        %vm750 = vcmask 1043456
        %v752 = vsel %vm750, %v675, 0
        %754 = vmatprep.subr.bf16.mxu0 0
        %755 = vmatpush1.bf16.msra.mxu0 0
        %756 = vmatprep.subr.bf16.mxu0 0
        %757 = vmatpush1.bf16.msra.mxu0 0
        %758 = vmatprep.subr.bf16.mxu0 0
        %759 = vmatpush1.bf16.msra.mxu0 0
        %760 = vmatprep.subr.bf16.mxu0 0
        %761 = vmatpush1.bf16.msra.mxu0 0
        %762 = vmatprep.subr.bf16.mxu0 0
        %763 = vmatpush1.bf16.msra.mxu0 0
        %764 = vmatprep.subr.bf16.mxu0 0
        %765 = vmatpush1.bf16.msra.mxu0 0
        %766 = vmatprep.subr.bf16.mxu0 0
        %767 = vmatpush1.bf16.msra.mxu0 0
        %768 = vmatprep.subr.bf16.mxu0 0
        %769 = vmatpush1.bf16.msra.mxu0 %v752
        %770 = vmatprep.subr.bf16.mxu0 0
        %771 = vmatpush2.bf16.msra.mxu0 0
        %772 = vmatprep.subr.bf16.mxu0 0
        %773 = vmatpush2.bf16.msra.mxu0 0
        %774 = vmatprep.subr.bf16.mxu0 0
        %775 = vmatpush2.bf16.msra.mxu0 0
        %776 = vmatprep.subr.bf16.mxu0 0
        %777 = vmatpush2.bf16.msra.mxu0 0
        %778 = vmatprep.subr.bf16.mxu0 0
        %779 = vmatpush2.bf16.msra.mxu0 0
        %780 = vmatprep.subr.bf16.mxu0 0
        %781 = vmatpush2.bf16.msra.mxu0 0
        %782 = vmatprep.subr.bf16.mxu0 0
        %783 = vmatpush2.bf16.msra.mxu0 0
        %784 = vmatprep.subr.bf16.mxu0 0
        %785 = vmatpush2.bf16.msra.mxu0 0
        %786 = vmatprep.mubr.bf16.mxu0 0
        %787 = vmatmul.mubr.bf16.gmra.mxu0 %v748
        %v788 = vpop.f32.mrf.mxu0
        %v789 = vadd.f32 0.0, %v788
        %v790 = vpop.f32.mrf.mxu0
        %v791 = vpop.f32.mrf.mxu0
        %v792 = vpop.f32.mrf.mxu0
        %793 = vdwg.mxu0
        %795 = vrot.lane.b32.xlu0 %v673, 112
        %v796 = vpop.permute.xlu0 %795
        %798 = vrot.lane.b32.xlu0 %v674, 112
        %v799 = vpop.permute.xlu0 %798
        %v801 = vsel %vm679, %v796, 0
        %v804 = vsel %vm679, %v799, 0
        %806 = vmatprep.subr.bf16.mxu0 0
        %807 = vmatpush1.bf16.xpose.msra.mxu0 0
        %808 = vmatprep.subr.bf16.mxu0 0
        %809 = vmatpush1.bf16.xpose.msra.mxu0 0
        %810 = vmatprep.subr.bf16.mxu0 0
        %811 = vmatpush1.bf16.xpose.msra.mxu0 0
        %812 = vmatprep.subr.bf16.mxu0 0
        %813 = vmatpush1.bf16.xpose.msra.mxu0 0
        %814 = vmatprep.subr.bf16.mxu0 0
        %815 = vmatpush1.bf16.xpose.msra.mxu0 0
        %816 = vmatprep.subr.bf16.mxu0 0
        %817 = vmatpush1.bf16.xpose.msra.mxu0 0
        %818 = vmatprep.subr.bf16.mxu0 0
        %819 = vmatpush1.bf16.xpose.msra.mxu0 0
        %820 = vmatprep.subr.bf16.mxu0 0
        %821 = vmatpush1.bf16.xpose.msra.mxu0 %v804
        %822 = vmatprep.subr.bf16.mxu0 0
        %823 = vmatpush2.bf16.xpose.msra.mxu0 0
        %824 = vmatprep.subr.bf16.mxu0 0
        %825 = vmatpush2.bf16.xpose.msra.mxu0 0
        %826 = vmatprep.subr.bf16.mxu0 0
        %827 = vmatpush2.bf16.xpose.msra.mxu0 0
        %828 = vmatprep.subr.bf16.mxu0 0
        %829 = vmatpush2.bf16.xpose.msra.mxu0 0
        %830 = vmatprep.subr.bf16.mxu0 0
        %831 = vmatpush2.bf16.xpose.msra.mxu0 0
        %832 = vmatprep.subr.bf16.mxu0 0
        %833 = vmatpush2.bf16.xpose.msra.mxu0 0
        %834 = vmatprep.subr.bf16.mxu0 0
        %835 = vmatpush2.bf16.xpose.msra.mxu0 0
        %836 = vmatprep.subr.bf16.mxu0 0
        %837 = vmatpush2.bf16.xpose.msra.mxu0 0
        %838 = vmatprep.mubr.bf16.mxu0 0
        %839 = vmatmul.mubr.bf16.gmra.mxu0 %v801
        %v840 = vpop.f32.mrf.mxu0
        %v841 = vadd.f32 0.0, %v840
        %v842 = vpop.f32.mrf.mxu0
        %v843 = vpop.f32.mrf.mxu0
        %v844 = vpop.f32.mrf.mxu0
        %845 = vdwg.mxu0
        %v846 = vmul.f32 %v841, 0.25
        %v847 = vadd.f32 %v846, %v731
        %v848 = vsel %vm734, %v847, -inf
        %849 = vmax.xlane.f32.xlu0 %v848
        %v850 = vpop.xlane.xlu0 %849
        %v851 = vsub.f32 %v847, %v850
        %v852 = vmul.f32 %v851, 1.442695
        %v853 = vpow.pop %v852
        %v854 = vsel %vm734, %v853, 0.0
        %855 = vadd.xlane.f32.xlu0 %v854
        %v856 = vpop.xlane.xlu0 %855
        %v857 = vrcp.pop %v856
        %v858 = vmul.f32 %v853, %v857
        %v859 = vpack.c.bf16 %v858, %v858
        %861 = vrot.lane.b32.xlu0 %v675, 112
        %v862 = vpop.permute.xlu0 %861
        %v864 = vsel %vm734, %v859, 0
        %v867 = vsel %vm750, %v862, 0
        %869 = vmatprep.subr.bf16.mxu0 0
        %870 = vmatpush1.bf16.msra.mxu0 0
        %871 = vmatprep.subr.bf16.mxu0 0
        %872 = vmatpush1.bf16.msra.mxu0 0
        %873 = vmatprep.subr.bf16.mxu0 0
        %874 = vmatpush1.bf16.msra.mxu0 0
        %875 = vmatprep.subr.bf16.mxu0 0
        %876 = vmatpush1.bf16.msra.mxu0 0
        %877 = vmatprep.subr.bf16.mxu0 0
        %878 = vmatpush1.bf16.msra.mxu0 0
        %879 = vmatprep.subr.bf16.mxu0 0
        %880 = vmatpush1.bf16.msra.mxu0 0
        %881 = vmatprep.subr.bf16.mxu0 0
        %882 = vmatpush1.bf16.msra.mxu0 0
        %883 = vmatprep.subr.bf16.mxu0 0
        %884 = vmatpush1.bf16.msra.mxu0 %v867
        %885 = vmatprep.subr.bf16.mxu0 0
        %886 = vmatpush2.bf16.msra.mxu0 0
        %887 = vmatprep.subr.bf16.mxu0 0
        %888 = vmatpush2.bf16.msra.mxu0 0
        %889 = vmatprep.subr.bf16.mxu0 0
        %890 = vmatpush2.bf16.msra.mxu0 0
        %891 = vmatprep.subr.bf16.mxu0 0
        %892 = vmatpush2.bf16.msra.mxu0 0
        %893 = vmatprep.subr.bf16.mxu0 0
        %894 = vmatpush2.bf16.msra.mxu0 0
        %895 = vmatprep.subr.bf16.mxu0 0
        %896 = vmatpush2.bf16.msra.mxu0 0
        %897 = vmatprep.subr.bf16.mxu0 0
        %898 = vmatpush2.bf16.msra.mxu0 0
        %899 = vmatprep.subr.bf16.mxu0 0
        %900 = vmatpush2.bf16.msra.mxu0 0
        %901 = vmatprep.mubr.bf16.mxu0 0
        %902 = vmatmul.mubr.bf16.gmra.mxu0 %v864
        %v903 = vpop.f32.mrf.mxu0
        %v904 = vadd.f32 0.0, %v903
        %v905 = vpop.f32.mrf.mxu0
        %v906 = vpop.f32.mrf.mxu0
        %v907 = vpop.f32.mrf.mxu0
        %908 = vdwg.mxu0
        %909 = vrot.lane.b32.xlu0 %v673, 96
        %v910 = vpop.permute.xlu0 %909
        %911 = vrot.lane.b32.xlu0 %v674, 96
        %v912 = vpop.permute.xlu0 %911
        %v914 = vsel %vm679, %v910, 0
        %v917 = vsel %vm679, %v912, 0
        %919 = vmatprep.subr.bf16.mxu0 0
        %920 = vmatpush1.bf16.xpose.msra.mxu0 0
        %921 = vmatprep.subr.bf16.mxu0 0
        %922 = vmatpush1.bf16.xpose.msra.mxu0 0
        %923 = vmatprep.subr.bf16.mxu0 0
        %924 = vmatpush1.bf16.xpose.msra.mxu0 0
        %925 = vmatprep.subr.bf16.mxu0 0
        %926 = vmatpush1.bf16.xpose.msra.mxu0 0
        %927 = vmatprep.subr.bf16.mxu0 0
        %928 = vmatpush1.bf16.xpose.msra.mxu0 0
        %929 = vmatprep.subr.bf16.mxu0 0
        %930 = vmatpush1.bf16.xpose.msra.mxu0 0
        %931 = vmatprep.subr.bf16.mxu0 0
        %932 = vmatpush1.bf16.xpose.msra.mxu0 0
        %933 = vmatprep.subr.bf16.mxu0 0
        %934 = vmatpush1.bf16.xpose.msra.mxu0 %v917
        %935 = vmatprep.subr.bf16.mxu0 0
        %936 = vmatpush2.bf16.xpose.msra.mxu0 0
        %937 = vmatprep.subr.bf16.mxu0 0
        %938 = vmatpush2.bf16.xpose.msra.mxu0 0
        %939 = vmatprep.subr.bf16.mxu0 0
        %940 = vmatpush2.bf16.xpose.msra.mxu0 0
        %941 = vmatprep.subr.bf16.mxu0 0
        %942 = vmatpush2.bf16.xpose.msra.mxu0 0
        %943 = vmatprep.subr.bf16.mxu0 0
        %944 = vmatpush2.bf16.xpose.msra.mxu0 0
        %945 = vmatprep.subr.bf16.mxu0 0
        %946 = vmatpush2.bf16.xpose.msra.mxu0 0
        %947 = vmatprep.subr.bf16.mxu0 0
        %948 = vmatpush2.bf16.xpose.msra.mxu0 0
        %949 = vmatprep.subr.bf16.mxu0 0
        %950 = vmatpush2.bf16.xpose.msra.mxu0 0
        %951 = vmatprep.mubr.bf16.mxu0 0
        %952 = vmatmul.mubr.bf16.gmra.mxu0 %v914
        %v953 = vpop.f32.mrf.mxu0
        %v954 = vadd.f32 0.0, %v953
        %v955 = vpop.f32.mrf.mxu0
        %v956 = vpop.f32.mrf.mxu0
        %v957 = vpop.f32.mrf.mxu0
        %958 = vdwg.mxu0
        %v959 = vmul.f32 %v954, 0.25
        %v960 = vadd.f32 %v959, %v731
        %v961 = vsel %vm734, %v960, -inf
        %962 = vmax.xlane.f32.xlu0 %v961
        %v963 = vpop.xlane.xlu0 %962
        %v964 = vsub.f32 %v960, %v963
        %v965 = vmul.f32 %v964, 1.442695
        %v966 = vpow.pop %v965
        %v967 = vsel %vm734, %v966, 0.0
        %968 = vadd.xlane.f32.xlu0 %v967
        %v969 = vpop.xlane.xlu0 %968
        %v970 = vrcp.pop %v969
        %v971 = vmul.f32 %v966, %v970
        %v972 = vpack.c.bf16 %v971, %v971
        %973 = vrot.lane.b32.xlu0 %v675, 96
        %v974 = vpop.permute.xlu0 %973
        %v976 = vsel %vm734, %v972, 0
        %v979 = vsel %vm750, %v974, 0
        %981 = vmatprep.subr.bf16.mxu0 0
        %982 = vmatpush1.bf16.msra.mxu0 0
        %983 = vmatprep.subr.bf16.mxu0 0
        %984 = vmatpush1.bf16.msra.mxu0 0
        %985 = vmatprep.subr.bf16.mxu0 0
        %986 = vmatpush1.bf16.msra.mxu0 0
        %987 = vmatprep.subr.bf16.mxu0 0
        %988 = vmatpush1.bf16.msra.mxu0 0
        %989 = vmatprep.subr.bf16.mxu0 0
        %990 = vmatpush1.bf16.msra.mxu0 0
        %991 = vmatprep.subr.bf16.mxu0 0
        %992 = vmatpush1.bf16.msra.mxu0 0
        %993 = vmatprep.subr.bf16.mxu0 0
        %994 = vmatpush1.bf16.msra.mxu0 0
        %995 = vmatprep.subr.bf16.mxu0 0
        %996 = vmatpush1.bf16.msra.mxu0 %v979
        %997 = vmatprep.subr.bf16.mxu0 0
        %998 = vmatpush2.bf16.msra.mxu0 0
        %999 = vmatprep.subr.bf16.mxu0 0
        %1000 = vmatpush2.bf16.msra.mxu0 0
        %1001 = vmatprep.subr.bf16.mxu0 0
        %1002 = vmatpush2.bf16.msra.mxu0 0
        %1003 = vmatprep.subr.bf16.mxu0 0
        %1004 = vmatpush2.bf16.msra.mxu0 0
        %1005 = vmatprep.subr.bf16.mxu0 0
        %1006 = vmatpush2.bf16.msra.mxu0 0
        %1007 = vmatprep.subr.bf16.mxu0 0
        %1008 = vmatpush2.bf16.msra.mxu0 0
        %1009 = vmatprep.subr.bf16.mxu0 0
        %1010 = vmatpush2.bf16.msra.mxu0 0
        %1011 = vmatprep.subr.bf16.mxu0 0
        %1012 = vmatpush2.bf16.msra.mxu0 0
        %1013 = vmatprep.mubr.bf16.mxu0 0
        %1014 = vmatmul.mubr.bf16.gmra.mxu0 %v976
        %v1015 = vpop.f32.mrf.mxu0
        %v1016 = vadd.f32 0.0, %v1015
        %v1017 = vpop.f32.mrf.mxu0
        %v1018 = vpop.f32.mrf.mxu0
        %v1019 = vpop.f32.mrf.mxu0
        %1020 = vdwg.mxu0
        %1021 = vrot.lane.b32.xlu0 %v673, 80
        %v1022 = vpop.permute.xlu0 %1021
        %1023 = vrot.lane.b32.xlu0 %v674, 80
        %v1024 = vpop.permute.xlu0 %1023
        %v1026 = vsel %vm679, %v1022, 0
        %v1029 = vsel %vm679, %v1024, 0
        %1031 = vmatprep.subr.bf16.mxu0 0
        %1032 = vmatpush1.bf16.xpose.msra.mxu0 0
        %1033 = vmatprep.subr.bf16.mxu0 0
        %1034 = vmatpush1.bf16.xpose.msra.mxu0 0
        %1035 = vmatprep.subr.bf16.mxu0 0
        %1036 = vmatpush1.bf16.xpose.msra.mxu0 0
        %1037 = vmatprep.subr.bf16.mxu0 0
        %1038 = vmatpush1.bf16.xpose.msra.mxu0 0
        %1039 = vmatprep.subr.bf16.mxu0 0
        %1040 = vmatpush1.bf16.xpose.msra.mxu0 0
        %1041 = vmatprep.subr.bf16.mxu0 0
        %1042 = vmatpush1.bf16.xpose.msra.mxu0 0
        %1043 = vmatprep.subr.bf16.mxu0 0
        %1044 = vmatpush1.bf16.xpose.msra.mxu0 0
        %1045 = vmatprep.subr.bf16.mxu0 0
        %1046 = vmatpush1.bf16.xpose.msra.mxu0 %v1029
        %1047 = vmatprep.subr.bf16.mxu0 0
        %1048 = vmatpush2.bf16.xpose.msra.mxu0 0
        %1049 = vmatprep.subr.bf16.mxu0 0
        %1050 = vmatpush2.bf16.xpose.msra.mxu0 0
        %1051 = vmatprep.subr.bf16.mxu0 0
        %1052 = vmatpush2.bf16.xpose.msra.mxu0 0
        %1053 = vmatprep.subr.bf16.mxu0 0
        %1054 = vmatpush2.bf16.xpose.msra.mxu0 0
        %1055 = vmatprep.subr.bf16.mxu0 0
        %1056 = vmatpush2.bf16.xpose.msra.mxu0 0
        %1057 = vmatprep.subr.bf16.mxu0 0
        %1058 = vmatpush2.bf16.xpose.msra.mxu0 0
        %1059 = vmatprep.subr.bf16.mxu0 0
        %1060 = vmatpush2.bf16.xpose.msra.mxu0 0
        %1061 = vmatprep.subr.bf16.mxu0 0
        %1062 = vmatpush2.bf16.xpose.msra.mxu0 0
        %1063 = vmatprep.mubr.bf16.mxu0 0
        %1064 = vmatmul.mubr.bf16.gmra.mxu0 %v1026
        %v1065 = vpop.f32.mrf.mxu0
        %v1066 = vadd.f32 0.0, %v1065
        %v1067 = vpop.f32.mrf.mxu0
        %v1068 = vpop.f32.mrf.mxu0
        %v1069 = vpop.f32.mrf.mxu0
        %1070 = vdwg.mxu0
        %v1071 = vmul.f32 %v1066, 0.25
        %v1072 = vadd.f32 %v1071, %v731
        %v1073 = vsel %vm734, %v1072, -inf
        %1074 = vmax.xlane.f32.xlu0 %v1073
        %v1075 = vpop.xlane.xlu0 %1074
        %v1076 = vsub.f32 %v1072, %v1075
        %v1077 = vmul.f32 %v1076, 1.442695
        %v1078 = vpow.pop %v1077
        %v1079 = vsel %vm734, %v1078, 0.0
        %1080 = vadd.xlane.f32.xlu0 %v1079
        %v1081 = vpop.xlane.xlu0 %1080
        %v1082 = vrcp.pop %v1081
        %v1083 = vmul.f32 %v1078, %v1082
        %v1084 = vpack.c.bf16 %v1083, %v1083
        %1085 = vrot.lane.b32.xlu0 %v675, 80
        %v1086 = vpop.permute.xlu0 %1085
        %v1088 = vsel %vm734, %v1084, 0
        %v1091 = vsel %vm750, %v1086, 0
        %1093 = vmatprep.subr.bf16.mxu0 0
        %1094 = vmatpush1.bf16.msra.mxu0 0
        %1095 = vmatprep.subr.bf16.mxu0 0
        %1096 = vmatpush1.bf16.msra.mxu0 0
        %1097 = vmatprep.subr.bf16.mxu0 0
        %1098 = vmatpush1.bf16.msra.mxu0 0
        %1099 = vmatprep.subr.bf16.mxu0 0
        %1100 = vmatpush1.bf16.msra.mxu0 0
        %1101 = vmatprep.subr.bf16.mxu0 0
        %1102 = vmatpush1.bf16.msra.mxu0 0
        %1103 = vmatprep.subr.bf16.mxu0 0
        %1104 = vmatpush1.bf16.msra.mxu0 0
        %1105 = vmatprep.subr.bf16.mxu0 0
        %1106 = vmatpush1.bf16.msra.mxu0 0
        %1107 = vmatprep.subr.bf16.mxu0 0
        %1108 = vmatpush1.bf16.msra.mxu0 %v1091
        %1109 = vmatprep.subr.bf16.mxu0 0
        %1110 = vmatpush2.bf16.msra.mxu0 0
        %1111 = vmatprep.subr.bf16.mxu0 0
        %1112 = vmatpush2.bf16.msra.mxu0 0
        %1113 = vmatprep.subr.bf16.mxu0 0
        %1114 = vmatpush2.bf16.msra.mxu0 0
        %1115 = vmatprep.subr.bf16.mxu0 0
        %1116 = vmatpush2.bf16.msra.mxu0 0
        %1117 = vmatprep.subr.bf16.mxu0 0
        %1118 = vmatpush2.bf16.msra.mxu0 0
        %1119 = vmatprep.subr.bf16.mxu0 0
        %1120 = vmatpush2.bf16.msra.mxu0 0
        %1121 = vmatprep.subr.bf16.mxu0 0
        %1122 = vmatpush2.bf16.msra.mxu0 0
        %1123 = vmatprep.subr.bf16.mxu0 0
        %1124 = vmatpush2.bf16.msra.mxu0 0
        %1125 = vmatprep.mubr.bf16.mxu0 0
        %1126 = vmatmul.mubr.bf16.gmra.mxu0 %v1088
        %v1127 = vpop.f32.mrf.mxu0
        %v1128 = vadd.f32 0.0, %v1127
        %v1129 = vpop.f32.mrf.mxu0
        %v1130 = vpop.f32.mrf.mxu0
        %v1131 = vpop.f32.mrf.mxu0
        %1132 = vdwg.mxu0
        %1133 = vrot.lane.b32.xlu0 %v673, 64
        %v1134 = vpop.permute.xlu0 %1133
        %1135 = vrot.lane.b32.xlu0 %v674, 64
        %v1136 = vpop.permute.xlu0 %1135
        %v1138 = vsel %vm679, %v1134, 0
        %v1141 = vsel %vm679, %v1136, 0
        %1143 = vmatprep.subr.bf16.mxu0 0
        %1144 = vmatpush1.bf16.xpose.msra.mxu0 0
        %1145 = vmatprep.subr.bf16.mxu0 0
        %1146 = vmatpush1.bf16.xpose.msra.mxu0 0
        %1147 = vmatprep.subr.bf16.mxu0 0
        %1148 = vmatpush1.bf16.xpose.msra.mxu0 0
        %1149 = vmatprep.subr.bf16.mxu0 0
        %1150 = vmatpush1.bf16.xpose.msra.mxu0 0
        %1151 = vmatprep.subr.bf16.mxu0 0
        %1152 = vmatpush1.bf16.xpose.msra.mxu0 0
        %1153 = vmatprep.subr.bf16.mxu0 0
        %1154 = vmatpush1.bf16.xpose.msra.mxu0 0
        %1155 = vmatprep.subr.bf16.mxu0 0
        %1156 = vmatpush1.bf16.xpose.msra.mxu0 0
        %1157 = vmatprep.subr.bf16.mxu0 0
        %1158 = vmatpush1.bf16.xpose.msra.mxu0 %v1141
        %1159 = vmatprep.subr.bf16.mxu0 0
        %1160 = vmatpush2.bf16.xpose.msra.mxu0 0
        %1161 = vmatprep.subr.bf16.mxu0 0
        %1162 = vmatpush2.bf16.xpose.msra.mxu0 0
        %1163 = vmatprep.subr.bf16.mxu0 0
        %1164 = vmatpush2.bf16.xpose.msra.mxu0 0
        %1165 = vmatprep.subr.bf16.mxu0 0
        %1166 = vmatpush2.bf16.xpose.msra.mxu0 0
        %1167 = vmatprep.subr.bf16.mxu0 0
        %1168 = vmatpush2.bf16.xpose.msra.mxu0 0
        %1169 = vmatprep.subr.bf16.mxu0 0
        %1170 = vmatpush2.bf16.xpose.msra.mxu0 0
        %1171 = vmatprep.subr.bf16.mxu0 0
        %1172 = vmatpush2.bf16.xpose.msra.mxu0 0
        %1173 = vmatprep.subr.bf16.mxu0 0
        %1174 = vmatpush2.bf16.xpose.msra.mxu0 0
        %1175 = vmatprep.mubr.bf16.mxu0 0
        %1176 = vmatmul.mubr.bf16.gmra.mxu0 %v1138
        %v1177 = vpop.f32.mrf.mxu0
        %v1178 = vadd.f32 0.0, %v1177
        %v1179 = vpop.f32.mrf.mxu0
        %v1180 = vpop.f32.mrf.mxu0
        %v1181 = vpop.f32.mrf.mxu0
        %1182 = vdwg.mxu0
        %v1183 = vmul.f32 %v1178, 0.25
        %v1184 = vadd.f32 %v1183, %v731
        %v1185 = vsel %vm734, %v1184, -inf
        %1186 = vmax.xlane.f32.xlu0 %v1185
        %v1187 = vpop.xlane.xlu0 %1186
        %v1188 = vsub.f32 %v1184, %v1187
        %v1189 = vmul.f32 %v1188, 1.442695
        %v1190 = vpow.pop %v1189
        %v1191 = vsel %vm734, %v1190, 0.0
        %1192 = vadd.xlane.f32.xlu0 %v1191
        %v1193 = vpop.xlane.xlu0 %1192
        %v1194 = vrcp.pop %v1193
        %v1195 = vmul.f32 %v1190, %v1194
        %v1196 = vpack.c.bf16 %v1195, %v1195
        %1197 = vrot.lane.b32.xlu0 %v675, 64
        %v1198 = vpop.permute.xlu0 %1197
        %v1200 = vsel %vm734, %v1196, 0
        %v1203 = vsel %vm750, %v1198, 0
        %1205 = vmatprep.subr.bf16.mxu0 0
        %1206 = vmatpush1.bf16.msra.mxu0 0
        %1207 = vmatprep.subr.bf16.mxu0 0
        %1208 = vmatpush1.bf16.msra.mxu0 0
        %1209 = vmatprep.subr.bf16.mxu0 0
        %1210 = vmatpush1.bf16.msra.mxu0 0
        %1211 = vmatprep.subr.bf16.mxu0 0
        %1212 = vmatpush1.bf16.msra.mxu0 0
        %1213 = vmatprep.subr.bf16.mxu0 0
        %1214 = vmatpush1.bf16.msra.mxu0 0
        %1215 = vmatprep.subr.bf16.mxu0 0
        %1216 = vmatpush1.bf16.msra.mxu0 0
        %1217 = vmatprep.subr.bf16.mxu0 0
        %1218 = vmatpush1.bf16.msra.mxu0 0
        %1219 = vmatprep.subr.bf16.mxu0 0
        %1220 = vmatpush1.bf16.msra.mxu0 %v1203
        %1221 = vmatprep.subr.bf16.mxu0 0
        %1222 = vmatpush2.bf16.msra.mxu0 0
        %1223 = vmatprep.subr.bf16.mxu0 0
        %1224 = vmatpush2.bf16.msra.mxu0 0
        %1225 = vmatprep.subr.bf16.mxu0 0
        %1226 = vmatpush2.bf16.msra.mxu0 0
        %1227 = vmatprep.subr.bf16.mxu0 0
        %1228 = vmatpush2.bf16.msra.mxu0 0
        %1229 = vmatprep.subr.bf16.mxu0 0
        %1230 = vmatpush2.bf16.msra.mxu0 0
        %1231 = vmatprep.subr.bf16.mxu0 0
        %1232 = vmatpush2.bf16.msra.mxu0 0
        %1233 = vmatprep.subr.bf16.mxu0 0
        %1234 = vmatpush2.bf16.msra.mxu0 0
        %1235 = vmatprep.subr.bf16.mxu0 0
        %1236 = vmatpush2.bf16.msra.mxu0 0
        %1237 = vmatprep.mubr.bf16.mxu0 0
        %1238 = vmatmul.mubr.bf16.gmra.mxu0 %v1200
        %v1239 = vpop.f32.mrf.mxu0
        %v1240 = vadd.f32 0.0, %v1239
        %v1241 = vpop.f32.mrf.mxu0
        %v1242 = vpop.f32.mrf.mxu0
        %v1243 = vpop.f32.mrf.mxu0
        %1244 = vdwg.mxu0
        %1245 = vrot.lane.b32.xlu0 %v673, 48
        %v1246 = vpop.permute.xlu0 %1245
        %1247 = vrot.lane.b32.xlu0 %v674, 48
        %v1248 = vpop.permute.xlu0 %1247
        %v1250 = vsel %vm679, %v1246, 0
        %v1253 = vsel %vm679, %v1248, 0
        %1255 = vmatprep.subr.bf16.mxu0 0
        %1256 = vmatpush1.bf16.xpose.msra.mxu0 0
        %1257 = vmatprep.subr.bf16.mxu0 0
        %1258 = vmatpush1.bf16.xpose.msra.mxu0 0
        %1259 = vmatprep.subr.bf16.mxu0 0
        %1260 = vmatpush1.bf16.xpose.msra.mxu0 0
        %1261 = vmatprep.subr.bf16.mxu0 0
        %1262 = vmatpush1.bf16.xpose.msra.mxu0 0
        %1263 = vmatprep.subr.bf16.mxu0 0
        %1264 = vmatpush1.bf16.xpose.msra.mxu0 0
        %1265 = vmatprep.subr.bf16.mxu0 0
        %1266 = vmatpush1.bf16.xpose.msra.mxu0 0
        %1267 = vmatprep.subr.bf16.mxu0 0
        %1268 = vmatpush1.bf16.xpose.msra.mxu0 0
        %1269 = vmatprep.subr.bf16.mxu0 0
        %1270 = vmatpush1.bf16.xpose.msra.mxu0 %v1253
        %1271 = vmatprep.subr.bf16.mxu0 0
        %1272 = vmatpush2.bf16.xpose.msra.mxu0 0
        %1273 = vmatprep.subr.bf16.mxu0 0
        %1274 = vmatpush2.bf16.xpose.msra.mxu0 0
        %1275 = vmatprep.subr.bf16.mxu0 0
        %1276 = vmatpush2.bf16.xpose.msra.mxu0 0
        %1277 = vmatprep.subr.bf16.mxu0 0
        %1278 = vmatpush2.bf16.xpose.msra.mxu0 0
        %1279 = vmatprep.subr.bf16.mxu0 0
        %1280 = vmatpush2.bf16.xpose.msra.mxu0 0
        %1281 = vmatprep.subr.bf16.mxu0 0
        %1282 = vmatpush2.bf16.xpose.msra.mxu0 0
        %1283 = vmatprep.subr.bf16.mxu0 0
        %1284 = vmatpush2.bf16.xpose.msra.mxu0 0
        %1285 = vmatprep.subr.bf16.mxu0 0
        %1286 = vmatpush2.bf16.xpose.msra.mxu0 0
        %1287 = vmatprep.mubr.bf16.mxu0 0
        %1288 = vmatmul.mubr.bf16.gmra.mxu0 %v1250
        %v1289 = vpop.f32.mrf.mxu0
        %v1290 = vadd.f32 0.0, %v1289
        %v1291 = vpop.f32.mrf.mxu0
        %v1292 = vpop.f32.mrf.mxu0
        %v1293 = vpop.f32.mrf.mxu0
        %1294 = vdwg.mxu0
        %v1295 = vmul.f32 %v1290, 0.25
        %v1296 = vadd.f32 %v1295, %v731
        %v1297 = vsel %vm734, %v1296, -inf
        %1298 = vmax.xlane.f32.xlu0 %v1297
        %v1299 = vpop.xlane.xlu0 %1298
        %v1300 = vsub.f32 %v1296, %v1299
        %v1301 = vmul.f32 %v1300, 1.442695
        %v1302 = vpow.pop %v1301
        %v1303 = vsel %vm734, %v1302, 0.0
        %1304 = vadd.xlane.f32.xlu0 %v1303
        %v1305 = vpop.xlane.xlu0 %1304
        %v1306 = vrcp.pop %v1305
        %v1307 = vmul.f32 %v1302, %v1306
        %v1308 = vpack.c.bf16 %v1307, %v1307
        %1309 = vrot.lane.b32.xlu0 %v675, 48
        %v1310 = vpop.permute.xlu0 %1309
        %v1312 = vsel %vm734, %v1308, 0
        %v1315 = vsel %vm750, %v1310, 0
        %1317 = vmatprep.subr.bf16.mxu0 0
        %1318 = vmatpush1.bf16.msra.mxu0 0
        %1319 = vmatprep.subr.bf16.mxu0 0
        %1320 = vmatpush1.bf16.msra.mxu0 0
        %1321 = vmatprep.subr.bf16.mxu0 0
        %1322 = vmatpush1.bf16.msra.mxu0 0
        %1323 = vmatprep.subr.bf16.mxu0 0
        %1324 = vmatpush1.bf16.msra.mxu0 0
        %1325 = vmatprep.subr.bf16.mxu0 0
        %1326 = vmatpush1.bf16.msra.mxu0 0
        %1327 = vmatprep.subr.bf16.mxu0 0
        %1328 = vmatpush1.bf16.msra.mxu0 0
        %1329 = vmatprep.subr.bf16.mxu0 0
        %1330 = vmatpush1.bf16.msra.mxu0 0
        %1331 = vmatprep.subr.bf16.mxu0 0
        %1332 = vmatpush1.bf16.msra.mxu0 %v1315
        %1333 = vmatprep.subr.bf16.mxu0 0
        %1334 = vmatpush2.bf16.msra.mxu0 0
        %1335 = vmatprep.subr.bf16.mxu0 0
        %1336 = vmatpush2.bf16.msra.mxu0 0
        %1337 = vmatprep.subr.bf16.mxu0 0
        %1338 = vmatpush2.bf16.msra.mxu0 0
        %1339 = vmatprep.subr.bf16.mxu0 0
        %1340 = vmatpush2.bf16.msra.mxu0 0
        %1341 = vmatprep.subr.bf16.mxu0 0
        %1342 = vmatpush2.bf16.msra.mxu0 0
        %1343 = vmatprep.subr.bf16.mxu0 0
        %1344 = vmatpush2.bf16.msra.mxu0 0
        %1345 = vmatprep.subr.bf16.mxu0 0
        %1346 = vmatpush2.bf16.msra.mxu0 0
        %1347 = vmatprep.subr.bf16.mxu0 0
        %1348 = vmatpush2.bf16.msra.mxu0 0
        %1349 = vmatprep.mubr.bf16.mxu0 0
        %1350 = vmatmul.mubr.bf16.gmra.mxu0 %v1312
        %v1351 = vpop.f32.mrf.mxu0
        %v1352 = vadd.f32 0.0, %v1351
        %v1353 = vpop.f32.mrf.mxu0
        %v1354 = vpop.f32.mrf.mxu0
        %v1355 = vpop.f32.mrf.mxu0
        %1356 = vdwg.mxu0
        %1357 = vrot.lane.b32.xlu0 %v673, 32
        %v1358 = vpop.permute.xlu0 %1357
        %1359 = vrot.lane.b32.xlu0 %v674, 32
        %v1360 = vpop.permute.xlu0 %1359
        %v1362 = vsel %vm679, %v1358, 0
        %v1365 = vsel %vm679, %v1360, 0
        %1367 = vmatprep.subr.bf16.mxu0 0
        %1368 = vmatpush1.bf16.xpose.msra.mxu0 0
        %1369 = vmatprep.subr.bf16.mxu0 0
        %1370 = vmatpush1.bf16.xpose.msra.mxu0 0
        %1371 = vmatprep.subr.bf16.mxu0 0
        %1372 = vmatpush1.bf16.xpose.msra.mxu0 0
        %1373 = vmatprep.subr.bf16.mxu0 0
        %1374 = vmatpush1.bf16.xpose.msra.mxu0 0
        %1375 = vmatprep.subr.bf16.mxu0 0
        %1376 = vmatpush1.bf16.xpose.msra.mxu0 0
        %1377 = vmatprep.subr.bf16.mxu0 0
        %1378 = vmatpush1.bf16.xpose.msra.mxu0 0
        %1379 = vmatprep.subr.bf16.mxu0 0
        %1380 = vmatpush1.bf16.xpose.msra.mxu0 0
        %1381 = vmatprep.subr.bf16.mxu0 0
        %1382 = vmatpush1.bf16.xpose.msra.mxu0 %v1365
        %1383 = vmatprep.subr.bf16.mxu0 0
        %1384 = vmatpush2.bf16.xpose.msra.mxu0 0
        %1385 = vmatprep.subr.bf16.mxu0 0
        %1386 = vmatpush2.bf16.xpose.msra.mxu0 0
        %1387 = vmatprep.subr.bf16.mxu0 0
        %1388 = vmatpush2.bf16.xpose.msra.mxu0 0
        %1389 = vmatprep.subr.bf16.mxu0 0
        %1390 = vmatpush2.bf16.xpose.msra.mxu0 0
        %1391 = vmatprep.subr.bf16.mxu0 0
        %1392 = vmatpush2.bf16.xpose.msra.mxu0 0
        %1393 = vmatprep.subr.bf16.mxu0 0
        %1394 = vmatpush2.bf16.xpose.msra.mxu0 0
        %1395 = vmatprep.subr.bf16.mxu0 0
        %1396 = vmatpush2.bf16.xpose.msra.mxu0 0
        %1397 = vmatprep.subr.bf16.mxu0 0
        %1398 = vmatpush2.bf16.xpose.msra.mxu0 0
        %1399 = vmatprep.mubr.bf16.mxu0 0
        %1400 = vmatmul.mubr.bf16.gmra.mxu0 %v1362
        %v1401 = vpop.f32.mrf.mxu0
        %v1402 = vadd.f32 0.0, %v1401
        %v1403 = vpop.f32.mrf.mxu0
        %v1404 = vpop.f32.mrf.mxu0
        %v1405 = vpop.f32.mrf.mxu0
        %1406 = vdwg.mxu0
        %v1407 = vmul.f32 %v1402, 0.25
        %v1408 = vadd.f32 %v1407, %v731
        %v1409 = vsel %vm734, %v1408, -inf
        %1410 = vmax.xlane.f32.xlu0 %v1409
        %v1411 = vpop.xlane.xlu0 %1410
        %v1412 = vsub.f32 %v1408, %v1411
        %v1413 = vmul.f32 %v1412, 1.442695
        %v1414 = vpow.pop %v1413
        %v1415 = vsel %vm734, %v1414, 0.0
        %1416 = vadd.xlane.f32.xlu0 %v1415
        %v1417 = vpop.xlane.xlu0 %1416
        %v1418 = vrcp.pop %v1417
        %v1419 = vmul.f32 %v1414, %v1418
        %v1420 = vpack.c.bf16 %v1419, %v1419
        %1421 = vrot.lane.b32.xlu0 %v675, 32
        %v1422 = vpop.permute.xlu0 %1421
        %v1424 = vsel %vm734, %v1420, 0
        %v1427 = vsel %vm750, %v1422, 0
        %1429 = vmatprep.subr.bf16.mxu0 0
        %1430 = vmatpush1.bf16.msra.mxu0 0
        %1431 = vmatprep.subr.bf16.mxu0 0
        %1432 = vmatpush1.bf16.msra.mxu0 0
        %1433 = vmatprep.subr.bf16.mxu0 0
        %1434 = vmatpush1.bf16.msra.mxu0 0
        %1435 = vmatprep.subr.bf16.mxu0 0
        %1436 = vmatpush1.bf16.msra.mxu0 0
        %1437 = vmatprep.subr.bf16.mxu0 0
        %1438 = vmatpush1.bf16.msra.mxu0 0
        %1439 = vmatprep.subr.bf16.mxu0 0
        %1440 = vmatpush1.bf16.msra.mxu0 0
        %1441 = vmatprep.subr.bf16.mxu0 0
        %1442 = vmatpush1.bf16.msra.mxu0 0
        %1443 = vmatprep.subr.bf16.mxu0 0
        %1444 = vmatpush1.bf16.msra.mxu0 %v1427
        %1445 = vmatprep.subr.bf16.mxu0 0
        %1446 = vmatpush2.bf16.msra.mxu0 0
        %1447 = vmatprep.subr.bf16.mxu0 0
        %1448 = vmatpush2.bf16.msra.mxu0 0
        %1449 = vmatprep.subr.bf16.mxu0 0
        %1450 = vmatpush2.bf16.msra.mxu0 0
        %1451 = vmatprep.subr.bf16.mxu0 0
        %1452 = vmatpush2.bf16.msra.mxu0 0
        %1453 = vmatprep.subr.bf16.mxu0 0
        %1454 = vmatpush2.bf16.msra.mxu0 0
        %1455 = vmatprep.subr.bf16.mxu0 0
        %1456 = vmatpush2.bf16.msra.mxu0 0
        %1457 = vmatprep.subr.bf16.mxu0 0
        %1458 = vmatpush2.bf16.msra.mxu0 0
        %1459 = vmatprep.subr.bf16.mxu0 0
        %1460 = vmatpush2.bf16.msra.mxu0 0
        %1461 = vmatprep.mubr.bf16.mxu0 0
        %1462 = vmatmul.mubr.bf16.gmra.mxu0 %v1424
        %v1463 = vpop.f32.mrf.mxu0
        %v1464 = vadd.f32 0.0, %v1463
        %v1465 = vpop.f32.mrf.mxu0
        %v1466 = vpop.f32.mrf.mxu0
        %v1467 = vpop.f32.mrf.mxu0
        %1468 = vdwg.mxu0
        %1469 = vrot.lane.b32.xlu0 %v673, 16
        %v1470 = vpop.permute.xlu0 %1469
        %1471 = vrot.lane.b32.xlu0 %v674, 16
        %v1472 = vpop.permute.xlu0 %1471
        %v1474 = vsel %vm679, %v1470, 0
        %v1477 = vsel %vm679, %v1472, 0
        %1479 = vmatprep.subr.bf16.mxu0 0
        %1480 = vmatpush1.bf16.xpose.msra.mxu0 0
        %1481 = vmatprep.subr.bf16.mxu0 0
        %1482 = vmatpush1.bf16.xpose.msra.mxu0 0
        %1483 = vmatprep.subr.bf16.mxu0 0
        %1484 = vmatpush1.bf16.xpose.msra.mxu0 0
        %1485 = vmatprep.subr.bf16.mxu0 0
        %1486 = vmatpush1.bf16.xpose.msra.mxu0 0
        %1487 = vmatprep.subr.bf16.mxu0 0
        %1488 = vmatpush1.bf16.xpose.msra.mxu0 0
        %1489 = vmatprep.subr.bf16.mxu0 0
        %1490 = vmatpush1.bf16.xpose.msra.mxu0 0
        %1491 = vmatprep.subr.bf16.mxu0 0
        %1492 = vmatpush1.bf16.xpose.msra.mxu0 0
        %1493 = vmatprep.subr.bf16.mxu0 0
        %1494 = vmatpush1.bf16.xpose.msra.mxu0 %v1477
        %1495 = vmatprep.subr.bf16.mxu0 0
        %1496 = vmatpush2.bf16.xpose.msra.mxu0 0
        %1497 = vmatprep.subr.bf16.mxu0 0
        %1498 = vmatpush2.bf16.xpose.msra.mxu0 0
        %1499 = vmatprep.subr.bf16.mxu0 0
        %1500 = vmatpush2.bf16.xpose.msra.mxu0 0
        %1501 = vmatprep.subr.bf16.mxu0 0
        %1502 = vmatpush2.bf16.xpose.msra.mxu0 0
        %1503 = vmatprep.subr.bf16.mxu0 0
        %1504 = vmatpush2.bf16.xpose.msra.mxu0 0
        %1505 = vmatprep.subr.bf16.mxu0 0
        %1506 = vmatpush2.bf16.xpose.msra.mxu0 0
        %1507 = vmatprep.subr.bf16.mxu0 0
        %1508 = vmatpush2.bf16.xpose.msra.mxu0 0
        %1509 = vmatprep.subr.bf16.mxu0 0
        %1510 = vmatpush2.bf16.xpose.msra.mxu0 0
        %1511 = vmatprep.mubr.bf16.mxu0 0
        %1512 = vmatmul.mubr.bf16.gmra.mxu0 %v1474
        %v1513 = vpop.f32.mrf.mxu0
        %v1514 = vadd.f32 0.0, %v1513
        %v1515 = vpop.f32.mrf.mxu0
        %v1516 = vpop.f32.mrf.mxu0
        %v1517 = vpop.f32.mrf.mxu0
        %1518 = vdwg.mxu0
        %v1519 = vmul.f32 %v1514, 0.25
        %v1520 = vadd.f32 %v1519, %v731
        %v1521 = vsel %vm734, %v1520, -inf
        %1522 = vmax.xlane.f32.xlu0 %v1521
        %v1523 = vpop.xlane.xlu0 %1522
        %v1524 = vsub.f32 %v1520, %v1523
        %v1525 = vmul.f32 %v1524, 1.442695
        %v1526 = vpow.pop %v1525
        %v1527 = vsel %vm734, %v1526, 0.0
        %1528 = vadd.xlane.f32.xlu0 %v1527
        %v1529 = vpop.xlane.xlu0 %1528
        %v1530 = vrcp.pop %v1529
        %v1531 = vmul.f32 %v1526, %v1530
        %v1532 = vpack.c.bf16 %v1531, %v1531
        %1533 = vrot.lane.b32.xlu0 %v675, 16
        %v1534 = vpop.permute.xlu0 %1533
        %v1536 = vsel %vm734, %v1532, 0
        %v1539 = vsel %vm750, %v1534, 0
        %1541 = vmatprep.subr.bf16.mxu0 0
        %1542 = vmatpush1.bf16.msra.mxu0 0
        %1543 = vmatprep.subr.bf16.mxu0 0
        %1544 = vmatpush1.bf16.msra.mxu0 0
        %1545 = vmatprep.subr.bf16.mxu0 0
        %1546 = vmatpush1.bf16.msra.mxu0 0
        %1547 = vmatprep.subr.bf16.mxu0 0
        %1548 = vmatpush1.bf16.msra.mxu0 0
        %1549 = vmatprep.subr.bf16.mxu0 0
        %1550 = vmatpush1.bf16.msra.mxu0 0
        %1551 = vmatprep.subr.bf16.mxu0 0
        %1552 = vmatpush1.bf16.msra.mxu0 0
        %1553 = vmatprep.subr.bf16.mxu0 0
        %1554 = vmatpush1.bf16.msra.mxu0 0
        %1555 = vmatprep.subr.bf16.mxu0 0
        %1556 = vmatpush1.bf16.msra.mxu0 %v1539
        %1557 = vmatprep.subr.bf16.mxu0 0
        %1558 = vmatpush2.bf16.msra.mxu0 0
        %1559 = vmatprep.subr.bf16.mxu0 0
        %1560 = vmatpush2.bf16.msra.mxu0 0
        %1561 = vmatprep.subr.bf16.mxu0 0
        %1562 = vmatpush2.bf16.msra.mxu0 0
        %1563 = vmatprep.subr.bf16.mxu0 0
        %1564 = vmatpush2.bf16.msra.mxu0 0
        %1565 = vmatprep.subr.bf16.mxu0 0
        %1566 = vmatpush2.bf16.msra.mxu0 0
        %1567 = vmatprep.subr.bf16.mxu0 0
        %1568 = vmatpush2.bf16.msra.mxu0 0
        %1569 = vmatprep.subr.bf16.mxu0 0
        %1570 = vmatpush2.bf16.msra.mxu0 0
        %1571 = vmatprep.subr.bf16.mxu0 0
        %1572 = vmatpush2.bf16.msra.mxu0 0
        %1573 = vmatprep.mubr.bf16.mxu0 0
        %1574 = vmatmul.mubr.bf16.gmra.mxu0 %v1536
        %v1575 = vpop.f32.mrf.mxu0
        %v1576 = vadd.f32 0.0, %v1575
        %v1577 = vpop.f32.mrf.mxu0
        %v1578 = vpop.f32.mrf.mxu0
        %v1579 = vpop.f32.mrf.mxu0
        %1580 = vdwg.mxu0
        %1582 = vrot.lane.b32.xlu0 %v904, 16
        %v1583 = vpop.permute.xlu0 %1582
        %1586 = vrot.lane.b32.xlu0 %v1016, 32
        %v1587 = vpop.permute.xlu0 %1586
        %1590 = vrot.lane.b32.xlu0 %v1128, 48
        %v1591 = vpop.permute.xlu0 %1590
        %1594 = vrot.lane.b32.xlu0 %v1240, 64
        %v1595 = vpop.permute.xlu0 %1594
        %1598 = vrot.lane.b32.xlu0 %v1352, 80
        %v1599 = vpop.permute.xlu0 %1598
        %1602 = vrot.lane.b32.xlu0 %v1464, 96
        %v1603 = vpop.permute.xlu0 %1602
        %1606 = vrot.lane.b32.xlu0 %v1576, 112
        %v1607 = vpop.permute.xlu0 %1606
        %v1609 = vsel %vm679, %v789, %v1583
        %vm1610 = vcmask 261120
        %v1611 = vsel %vm1610, %v1609, %v1587
        %vm1612 = vcmask 392192
        %v1613 = vsel %vm1612, %v1611, %v1591
        %vm1614 = vcmask 523264
        %v1615 = vsel %vm1614, %v1613, %v1595
        %vm1616 = vcmask 654336
        %v1617 = vsel %vm1616, %v1615, %v1599
        %vm1618 = vcmask 785408
        %v1619 = vsel %vm1618, %v1617, %v1603
        %vm1620 = vcmask 916480
        %v1621 = vsel %vm1620, %v1619, %v1607
        %v1622 = vpack.c.bf16 %v1621, %v1621
        %v1623 = vld [vmem:[#allocation8] sm:$0xf]
        %v1624 = vld [vmem:[#allocation8 + $0x4] sm:$0xf]
        %v1625 = vld [vmem:[#allocation8 + $0x8] sm:$0xf]
        %v1626 = vld [vmem:[#allocation8 + $0xc] sm:$0xf]
        %v1627 = vld [vmem:[#allocation8 + $0x10] sm:$0xf]
        %v1628 = vld [vmem:[#allocation8 + $0x14] sm:$0xf]
        %v1629 = vld [vmem:[#allocation8 + $0x18] sm:$0xf]
        %v1630 = vld [vmem:[#allocation8 + $0x1c] sm:$0xf]
        %v1631 = vld [vmem:[#allocation8 + $0x20] sm:$0xf]
        %v1632 = vld [vmem:[#allocation8 + $0x24] sm:$0xf]
        %v1633 = vld [vmem:[#allocation8 + $0x28] sm:$0xf]
        %v1634 = vld [vmem:[#allocation8 + $0x2c] sm:$0xf]
        %v1635 = vld [vmem:[#allocation8 + $0x30] sm:$0xf]
        %v1636 = vld [vmem:[#allocation8 + $0x34] sm:$0xf]
        %v1637 = vld [vmem:[#allocation8 + $0x38] sm:$0xf]
        %v1638 = vld [vmem:[#allocation8 + $0x3c] sm:$0xf]
        %v1655 = vunpack.c.l.b16 %v1623
        %v1656 = vunpack.c.l.b16 %v1624
        %v1657 = vunpack.c.l.b16 %v1625
        %v1658 = vunpack.c.l.b16 %v1626
        %v1659 = vunpack.c.l.b16 %v1627
        %v1660 = vunpack.c.l.b16 %v1628
        %v1661 = vunpack.c.l.b16 %v1629
        %v1662 = vunpack.c.l.b16 %v1630
        %v1663 = vunpack.c.l.b16 %v1631
        %v1664 = vunpack.c.l.b16 %v1632
        %v1665 = vunpack.c.l.b16 %v1633
        %v1666 = vunpack.c.l.b16 %v1634
        %v1667 = vunpack.c.l.b16 %v1635
        %v1668 = vunpack.c.l.b16 %v1636
        %v1669 = vunpack.c.l.b16 %v1637
        %v1670 = vunpack.c.l.b16 %v1638
        %v1671 = vpack.c.b16 %v1656, %v1655
        %v1672 = vpack.c.b16 %v1658, %v1657
        %v1673 = vpack.c.b16 %v1660, %v1659
        %v1674 = vpack.c.b16 %v1662, %v1661
        %v1675 = vpack.c.b16 %v1664, %v1663
        %v1676 = vpack.c.b16 %v1666, %v1665
        %v1677 = vpack.c.b16 %v1668, %v1667
        %v1678 = vpack.c.b16 %v1670, %v1669
        %1687 = vmatprep.subr.bf16.mxu0 0
        %1688 = vmatpush1.bf16.msra.mxu0 %v1678
        %1689 = vmatprep.subr.bf16.mxu0 0
        %1690 = vmatpush1.bf16.msra.mxu0 %v1677
        %1691 = vmatprep.subr.bf16.mxu0 0
        %1692 = vmatpush1.bf16.msra.mxu0 %v1676
        %1693 = vmatprep.subr.bf16.mxu0 0
        %1694 = vmatpush1.bf16.msra.mxu0 %v1675
        %1695 = vmatprep.subr.bf16.mxu0 0
        %1696 = vmatpush1.bf16.msra.mxu0 %v1674
        %1697 = vmatprep.subr.bf16.mxu0 0
        %1698 = vmatpush1.bf16.msra.mxu0 %v1673
        %1699 = vmatprep.subr.bf16.mxu0 0
        %1700 = vmatpush1.bf16.msra.mxu0 %v1672
        %1701 = vmatprep.subr.bf16.mxu0 0
        %1702 = vmatpush1.bf16.msra.mxu0 %v1671
        %1703 = vmatprep.subr.bf16.mxu0 0
        %1704 = vmatpush2.bf16.msra.mxu0 0
        %1705 = vmatprep.subr.bf16.mxu0 0
        %1706 = vmatpush2.bf16.msra.mxu0 0
        %1707 = vmatprep.subr.bf16.mxu0 0
        %1708 = vmatpush2.bf16.msra.mxu0 0
        %1709 = vmatprep.subr.bf16.mxu0 0
        %1710 = vmatpush2.bf16.msra.mxu0 0
        %1711 = vmatprep.subr.bf16.mxu0 0
        %1712 = vmatpush2.bf16.msra.mxu0 0
        %1713 = vmatprep.subr.bf16.mxu0 0
        %1714 = vmatpush2.bf16.msra.mxu0 0
        %1715 = vmatprep.subr.bf16.mxu0 0
        %1716 = vmatpush2.bf16.msra.mxu0 0
        %1717 = vmatprep.subr.bf16.mxu0 0
        %1718 = vmatpush2.bf16.msra.mxu0 0
        %1719 = vmatprep.mubr.bf16.mxu0 0
        %1720 = vmatmul.mubr.bf16.gmra.mxu0 %v1622
        %v1721 = vpop.f32.mrf.mxu0
        %v1722 = vadd.f32 0.0, %v1721
        %v1723 = vpop.f32.mrf.mxu0
        %v1724 = vpop.f32.mrf.mxu0
        %v1725 = vpop.f32.mrf.mxu0
        %1726 = vdwg.mxu0
        %v1727 = vadd.f32 %v385, %v1722
        %v1728 = vld [vmem:[%s7] sm:$0x1]
        %v1730 = vlaneseq
        %v1731 = vshrl.u32 %v1730, 7
        %v1732 = vsub.s32 0, %v1731
        %v1733 = vrot.slane %v1728, %v1732
        %v1735 = vadd.f32 %v1727, %v1733
        %1736 = vst [vmem:[%s383] sm:$0xff] %v1735
        %s1737 = sand.u32 %s215, 1
        %s1738 = scalar_lea.sflag [#allocation4], %s1737
        %s1739 = sand.u32 %s215, 1
        %s1740 = smul.addr %s1739, 8
        %s1741 = scalar_lea.vmem [#allocation10], %s1740
        // Predicated region
        $region69: #{tpu_custom_call.1} parent=51 // pred_check
          %p1742 = pneg %p225
        $region70: #{tpu_custom_call.1} parent=51 // pred_check_branch
          %1744 = sbr.rel (%p1742) target = $region72
        $region71: #{tpu_custom_call.1} parent=51 // pred_region
          %s1746 = ssub.s32 128, 128
          %1747 = vsyncadd %s1738, %s1746
          %s1748 = smul.addr %s29, 128
          %s1749 = scalar_lea.hbm %s8, %s1748
          %s1751 = sshll.u32 %s1741, 4
          %s1752 = int_to_ptr.vmem [resolvable:$true] %s1751
          %1754 = dma.vmem_to_hbm [thread:$0]  %s1752, 128, %s1749, %s1738
        $region72: #{tpu_custom_call.1} parent=51 // pred_fallthru
          _
      $region52: #{tpu_custom_call.1} parent=5 // pred_fallthru
        _
      %p1755 = scmp.le.s32.totalorder 2, %s24
      // Predicated region
      $region73: #{tpu_custom_call.1} parent=5 // pred_check
        %p1756 = pneg %p1755
      $region74: #{tpu_custom_call.1} parent=5 // pred_check_branch
        %1758 = sbr.rel (%p1756) target = $region76
      $region75: #{tpu_custom_call.1} parent=5 // pred_region
        %s1759 = ssub.s32 %s24, 2
        // Predicated region
        $region77: #{tpu_custom_call.1} parent=75 // pred_check
          %p1760 = pneg %p231
        $region78: #{tpu_custom_call.1} parent=75 // pred_check_branch
          %1762 = sbr.rel (%p1760) target = $region80
        $region79: #{tpu_custom_call.1} parent=75 // pred_region
          %s1763 = sand.u32 %s216, 1
          %s1764 = scalar_lea.sflag [#allocation4], %s1763
          %s1765 = sand.u32 %s216, 1
          %s1766 = smul.addr %s1765, 8
          %s1767 = scalar_lea.vmem [#allocation10], %s1766
          %1768 = dma.done %s1764, 128
        $region80: #{tpu_custom_call.1} parent=75 // pred_fallthru
          _
      $region76: #{tpu_custom_call.1} parent=5 // pred_fallthru
        _
    $region6: #{tpu_custom_call.1} parent=1 // loop_footer
      %s28 = sadd.s32 1, %s24
    $region7: #{tpu_custom_call.1} parent=1 // loop_footer_branch
      %23 = sbr.rel target = $region3
    $region8: #{tpu_custom_call.1} parent=1 // loop_exit
      _
    %1769 = vsyncpa [#allocation3], 1
    %s1770 = scalar_lea.sflag [#allocation3], 1
    %1771 = vsyncpa %s1770, 1
    %1772 = vsyncpa [#allocation6], 1
    %s1773 = scalar_lea.sflag [#allocation6], 1
    %1774 = vsyncpa %s1773, 1
    %1775 = vsyncpa [#allocation9], 1
    %1776 = vsyncpa [#allocation4], 1
    %s1777 = scalar_lea.sflag [#allocation4], 1
    %1778 = vsyncpa %s1777, 1

</llo_original>
